<compile_context>
chip_gen: v7x
topology: tpu7x:2x2x1
jax: 0.10.0
libtpu: 0.0.40
codegen_flags: <defaults>
</compile_context>

<pallas_src>
import functools

import jax
import jax.numpy as jnp
from jax.experimental import pallas as pl
from jax.experimental.pallas import tpu as pltpu


def _round_up(x, m):
    return ((x + m - 1) // m) * m


def _cdiv(a, b):
    return -(-a // b)


def _default_sizes():
    """Generation-aware (tile_n, vmem_limit_bytes)."""
    try:
        vmem = int(pltpu.get_tpu_info().vmem_capacity_bytes)
    except Exception:
        vmem = 64 * 1024 * 1024                      # assume smallest (v7x)
    if vmem >= 100 * 1024 * 1024:                    # v5e / v6e: 128 MiB VMEM
        return 2048, 64 * 1024 * 1024
    return 1024, 32 * 1024 * 1024                    # v7x: 64 MiB VMEM


def _gnn_kernel(nvalid_ref,                          # scalar prefetch (SMEM)
                x_ref, wpre_ref, bpre_ref, wab_ref, bab_ref, wc_ref, bc_ref,
                m_out_ref, l_out_ref, acc_out_ref,   # per-shard partials
                m_sc, l_sc, acc_sc,                  # VMEM scratch
                *, embed_dim, tile_n, tiles_per_shard):
    c = pl.program_id(0)                             # shard (TensorCore) axis
    i = pl.program_id(1)                             # N-tile axis within shard

    # ---- init running stats on the first tile of each shard ----
    @pl.when(i == 0)
    def _init():
        m_sc[...] = jnp.full(m_sc.shape, -jnp.inf, m_sc.dtype)
        l_sc[...] = jnp.zeros(l_sc.shape, l_sc.dtype)
        acc_sc[...] = jnp.zeros(acc_sc.shape, acc_sc.dtype)

    # ---- preprocess: Linear (bf16 MXU, f32 accumulate) + ReLU (Dropout = identity) ----
    x = x_ref[...]                                                   # bf16 [TN, in_dim]
    h = jnp.dot(x, wpre_ref[...], preferred_element_type=jnp.float32) + bpre_ref[...]
    h = jnp.maximum(h, 0.0)                                          # f32 [TN, E]

    # ---- Attn_Net_Gated: fused (Wa|Wb) bf16 matmul, f32 gate activations ----
    g = jnp.dot(h.astype(jnp.bfloat16), wab_ref[...],
                preferred_element_type=jnp.float32) + bab_ref[...]   # f32 [TN, 2E]
    a = jnp.tanh(g[:, :embed_dim])
    b = jax.nn.sigmoid(g[:, embed_dim:])
    gated = a * b                                                    # f32 [TN, E]

    # attention score: lane reduce instead of an [E,1] matmul
    A = jnp.sum(gated * wc_ref[...], axis=-1, keepdims=True) + bc_ref[...]  # [TN, 1]

    # mask padded tail rows using the dynamic (scalar-prefetched) valid count
    row = ((c * tiles_per_shard + i) * tile_n
           + jax.lax.broadcasted_iota(jnp.int32, (tile_n, 1), 0))
    A = jnp.where(row < nvalid_ref[0], A, jnp.float32(-1e30))

    # ---- online softmax update (all f32) ----
    m_old = m_sc[...]                                                # [1, 1]
    m_new = jnp.maximum(m_old, jnp.max(A))                           # [1, 1]
    alpha = jnp.exp(m_old - m_new)                                   # rescale old stats
    p = jnp.exp(A - m_new)                                           # [TN, 1]

    l_sc[...] = alpha * l_sc[...] + jnp.sum(p)
    # weighted pooling as an MXU contraction over the N (sublane) axis: acc += p^T @ h
    acc_sc[...] = alpha * acc_sc[...] + jax.lax.dot_general(
        p, h, (((0,), (0,)), ((), ())), preferred_element_type=jnp.float32)
    m_sc[...] = m_new

    # ---- per-shard writeback of partial stats on the last tile ----
    @pl.when(i == pl.num_programs(1) - 1)
    def _writeback():
        m_out_ref[0] = m_sc[...]                                     # (1,1)
        l_out_ref[0] = l_sc[...]                                     # (1,1)
        acc_out_ref[0] = acc_sc[...]                                 # (1,E)


def prepare_params(params):
    """One-time parameter prep: fuse Wa|Wb, lay Wc along lanes, cast matmul
    weights to bf16.  Do NOT call per forward (feedback: hoist the concat)."""
    (wpre, bpre, wa, ba, wb, bb, wc, bc, wfc, bfc) = params
    embed_dim = wpre.shape[1]
    return {
        "wpre": wpre.astype(jnp.bfloat16),                 # [in_dim, E]
        "bpre": bpre.astype(jnp.float32),                  # [1, E]
        "wab": jnp.concatenate([wa, wb], axis=1).astype(jnp.bfloat16),  # [E, 2E]
        "bab": jnp.concatenate([ba, bb], axis=1).astype(jnp.float32),   # [1, 2E]
        "wc": wc.reshape(1, embed_dim).astype(jnp.float32),             # [1, E]
        "bc": bc.astype(jnp.float32),                      # [1, 1]
        "wfc": wfc.astype(jnp.float32),                    # [E, C]   (epilogue, tiny)
        "bfc": bfc.astype(jnp.float32),                    # [1, C]
        "embed_dim": embed_dim,
    }


def gnn_forward(x, prep, *, tile_n=None, num_shards=2, vmem_limit_bytes=None):
    """x: [N, in_dim] node features. Returns logits [1, n_classes] (f32)."""
    wpre, bpre = prep["wpre"], prep["bpre"]
    wab, bab = prep["wab"], prep["bab"]
    wc, bc = prep["wc"], prep["bc"]
    wfc, bfc = prep["wfc"], prep["bfc"]
    embed_dim = prep["embed_dim"]

    n, in_dim = x.shape

    d_tile, d_vmem = _default_sizes()
    tile_n = tile_n if tile_n is not None else d_tile
    vmem_limit_bytes = vmem_limit_bytes if vmem_limit_bytes is not None else d_vmem

    # Tile over N; shard the N reduction over num_shards (parallel grid axis ->
    # split across the 2 TensorCores on v7x, harmless outer loop on 1-TC chips).
    per_shard = _cdiv(n, num_shards)
    tn = max(8, min(_round_up(tile_n, 8), _round_up(per_shard, 8)))
    tiles_per_shard = max(1, _cdiv(n, num_shards * tn))
    n_pad = num_shards * tiles_per_shard * tn

    x = x.astype(jnp.bfloat16)                        # halve the streamed HBM bytes
    if n_pad != n:
        x = jnp.pad(x, ((0, n_pad - n), (0, 0)))      # padded rows masked in-kernel

    # Dynamic valid count via scalar prefetch (no recompile per exact N).
    n_valid = jnp.array([n], dtype=jnp.int32)

    kernel = functools.partial(_gnn_kernel, embed_dim=embed_dim, tile_n=tn,
                               tiles_per_shard=tiles_per_shard)

    # index_maps receive the scalar-prefetch ref as a trailing positional arg.
    x_map = lambda c, i, nref: (c * tiles_per_shard + i, 0)
    const = lambda c, i, nref: (0, 0)
    out_map = lambda c, i, nref: (c, 0, 0)

    single = pl.Buffered(1)                           # weights: DMA once, 1 buffer
    in_specs = [
        pl.BlockSpec((tn, in_dim), x_map),            # x tiles stream over N
        pl.BlockSpec(wpre.shape, const, pipeline_mode=single),
        pl.BlockSpec(bpre.shape, const, pipeline_mode=single),
        pl.BlockSpec(wab.shape, const, pipeline_mode=single),
        pl.BlockSpec(bab.shape, const, pipeline_mode=single),
        pl.BlockSpec(wc.shape, const, pipeline_mode=single),
        pl.BlockSpec(bc.shape, const, pipeline_mode=single),
    ]
    out_specs = (
        pl.BlockSpec((1, 1, 1), out_map),             # per-shard m
        pl.BlockSpec((1, 1, 1), out_map),             # per-shard l
        pl.BlockSpec((1, 1, embed_dim), out_map),     # per-shard weighted sum
    )
    out_shape = (
        jax.ShapeDtypeStruct((num_shards, 1, 1), jnp.float32),
        jax.ShapeDtypeStruct((num_shards, 1, 1), jnp.float32),
        jax.ShapeDtypeStruct((num_shards, 1, embed_dim), jnp.float32),
    )

    weight_bytes = (wpre.size * 2 + bpre.size * 4 + wab.size * 2 + bab.size * 4
                    + wc.size * 4 + bc.size * 4)
    cost = pl.CostEstimate(
        flops=int(2 * n_pad * (in_dim * embed_dim + 2 * embed_dim * embed_dim
                               + 3 * embed_dim)),
        transcendentals=int(n_pad * (2 * embed_dim + 1)),
        bytes_accessed=int(n_pad * in_dim * 2 + weight_bytes
                           + num_shards * (embed_dim + 2) * 4),
    )

    m_p, l_p, acc_p = pl.pallas_call(
        kernel,
        out_shape=out_shape,
        grid_spec=pltpu.PrefetchScalarGridSpec(
            num_scalar_prefetch=1,
            grid=(num_shards, tiles_per_shard),
            in_specs=in_specs,
            out_specs=out_specs,
            scratch_shapes=[
                pltpu.VMEM((1, 1), jnp.float32),            # running max m
                pltpu.VMEM((1, 1), jnp.float32),            # running denom l
                pltpu.VMEM((1, embed_dim), jnp.float32),    # running weighted sum
            ],
        ),
        compiler_params=pltpu.CompilerParams(
            dimension_semantics=("parallel", "arbitrary"),  # shard N across TCs (v7x)
            vmem_limit_bytes=vmem_limit_bytes,
        ),
        cost_estimate=cost,
    )(n_valid, x, wpre, bpre, wab, bab, wc, bc)

    # ---- exact online-softmax combine of per-shard partials + final FC (tiny) ----
    m = m_p[:, 0, 0]                                   # [S]
    gm = jnp.max(m)
    scale = jnp.exp(m - gm)                            # fully-padded shards -> 0
    l = jnp.sum(scale * l_p[:, 0, 0])
    pooled = jnp.sum(scale[:, None] * acc_p[:, 0, :], axis=0) / l    # [E]
    logits = jnp.dot(pooled[None, :], wfc,
                     preferred_element_type=jnp.float32) + bfc       # [1, C]
    return logits


def gnn_reference(x, params):
    """Pure-JAX f32 reference of the same forward, for validation."""
    (wpre, bpre, wa, ba, wb, bb, wc, bc, wfc, bfc) = params
    hp = jax.lax.Precision.HIGHEST
    h = jnp.maximum(jnp.dot(x, wpre, precision=hp) + bpre, 0.0)
    a = jnp.tanh(jnp.dot(h, wa, precision=hp) + ba)
    b = jax.nn.sigmoid(jnp.dot(h, wb, precision=hp) + bb)
    A = jnp.dot(a * b, wc, precision=hp) + bc          # [N, 1]
    A = jax.nn.softmax(A.T, axis=1)                    # [1, N]
    pooled = jnp.dot(A, h, precision=hp)               # [1, E]
    return jnp.dot(pooled, wfc, precision=hp) + bfc    # [1, C]


if __name__ == "__main__":
    # Small, module-consistent shapes; N intentionally not a multiple of the
    # tile (or of 8) so tail masking + the 2-shard split/combine are exercised.
    N, in_dim, embed_dim, n_classes = 203, 64, 128, 4
    TILE_N = 64                                        # -> 2 shards x 2 tiles

    key = jax.random.PRNGKey(0)
    ks = jax.random.split(key, 12)

    def lin(kw, kb, fan_in, fan_out):
        # PyTorch-Linear-like init (uniform +/- 1/sqrt(fan_in)), stored
        # pre-transposed as [fan_in, fan_out]; bias as [1, fan_out].
        bound = 1.0 / jnp.sqrt(fan_in)
        w = jax.random.uniform(kw, (fan_in, fan_out), jnp.float32, -bound, bound)
        b = jax.random.uniform(kb, (1, fan_out), jnp.float32, -bound, bound)
        return w, b

    wpre, bpre = lin(ks[0], ks[1], in_dim, embed_dim)      # preprocess Linear
    wa, ba = lin(ks[2], ks[3], embed_dim, embed_dim)       # attention_a Linear
    wb, bb = lin(ks[4], ks[5], embed_dim, embed_dim)       # attention_b Linear
    wc, bc = lin(ks[6], ks[7], embed_dim, 1)               # attention_c Linear
    wfc, bfc = lin(ks[8], ks[9], embed_dim, n_classes)     # final fc

    params = (wpre, bpre, wa, ba, wb, bb, wc, bc, wfc, bfc)
    prep = prepare_params(params)                          # hoisted once

    # Graph node features (graph_data.x). edge_index unused (num_layers = 0).
    x = jax.random.normal(ks[10], (N, in_dim), jnp.float32)

    logits = gnn_forward(x, prep, tile_n=TILE_N, num_shards=2)
    jax.block_until_ready(logits)

    ref = gnn_reference(x, params)
    assert logits.shape == (1, n_classes)
    # bf16 matmul inputs (f32 accumulate / softmax stats) -> loosen vs the
    # HIGHEST-precision f32 reference.
    assert jnp.allclose(logits, ref, atol=3e-2, rtol=3e-2), (
        f"max abs err {jnp.max(jnp.abs(logits - ref))}")

    print("KERNEL_OK")
</pallas_src>

<mosaic_0001>
module attributes {stable_mosaic.version = 11 : i64} {
  func.func @_gnn_kernel(%arg0: i32, %arg1: i32, %arg2: memref<1xi32, #tpu.memory_space<smem>>, %arg3: memref<64x64xbf16, #tpu.memory_space<vmem>>, %arg4: memref<64x128xbf16, #tpu.memory_space<vmem>>, %arg5: memref<1x128xf32, #tpu.memory_space<vmem>>, %arg6: memref<128x256xbf16, #tpu.memory_space<vmem>>, %arg7: memref<1x256xf32, #tpu.memory_space<vmem>>, %arg8: memref<1x128xf32, #tpu.memory_space<vmem>>, %arg9: memref<1x1xf32, #tpu.memory_space<vmem>>, %arg10: memref<1x1x1xf32, #tpu.memory_space<vmem>>, %arg11: memref<1x1x1xf32, #tpu.memory_space<vmem>>, %arg12: memref<1x1x128xf32, #tpu.memory_space<vmem>>, %arg13: memref<1x1xf32, #tpu.memory_space<vmem>>, %arg14: memref<1x1xf32, #tpu.memory_space<vmem>>, %arg15: memref<1x128xf32, #tpu.memory_space<vmem>>) attributes {dimension_semantics = [#tpu.dimension_semantics<parallel>, #tpu.dimension_semantics<arbitrary>], iteration_bounds = array<i64: 2, 2>, scalar_prefetch = 1 : i64, scratch_operands = 3 : i64, tpu.core_type = #tpu.core_type<tc>, window_params = [{transform_indices = @transform_0, window_bounds = array<i64: 64, 64>}, {pipeline_mode = #tpu.pipeline_mode<synchronous>, transform_indices = @transform_1, window_bounds = array<i64: 64, 128>}, {pipeline_mode = #tpu.pipeline_mode<synchronous>, transform_indices = @transform_2, window_bounds = array<i64: 1, 128>}, {pipeline_mode = #tpu.pipeline_mode<synchronous>, transform_indices = @transform_3, window_bounds = array<i64: 128, 256>}, {pipeline_mode = #tpu.pipeline_mode<synchronous>, transform_indices = @transform_4, window_bounds = array<i64: 1, 256>}, {pipeline_mode = #tpu.pipeline_mode<synchronous>, transform_indices = @transform_5, window_bounds = array<i64: 1, 128>}, {pipeline_mode = #tpu.pipeline_mode<synchronous>, transform_indices = @transform_6, window_bounds = array<i64: 1, 1>}, {transform_indices = @transform_7, window_bounds = array<i64: 1, 1, 1>}, {transform_indices = @transform_8, window_bounds = array<i64: 1, 1, 1>}, {transform_indices = @transform_9, window_bounds = array<i64: 1, 1, 128>}]} {
    %c0_i32 = arith.constant 0 : i32
    %0 = arith.cmpi eq, %arg1, %c0_i32 : i32
    %1 = arith.extui %0 : i1 to i32
    %c0_i32_0 = arith.constant 0 : i32
    %2 = arith.cmpi ne, %1, %c0_i32_0 : i32
    scf.if %2 {
      %cst_36 = arith.constant 0xFF800000 : f32
      %76 = vector.broadcast %cst_36 : f32 to vector<1x1xf32>
      %c0_37 = arith.constant 0 : index
      %c0_38 = arith.constant 0 : index
      %77 = vector.load %arg13[%c0_37, %c0_38] : memref<1x1xf32, #tpu.memory_space<vmem>>, vector<1x1xf32>
      tpu.vector_store %arg13[%c0_37, %c0_38], %76 {strides = array<i32>} : memref<1x1xf32, #tpu.memory_space<vmem>>, vector<1x1xf32>,
      %cst_39 = arith.constant 0.000000e+00 : f32
      %78 = vector.broadcast %cst_39 : f32 to vector<1x1xf32>
      %c0_40 = arith.constant 0 : index
      %c0_41 = arith.constant 0 : index
      %79 = vector.load %arg14[%c0_40, %c0_41] : memref<1x1xf32, #tpu.memory_space<vmem>>, vector<1x1xf32>
      tpu.vector_store %arg14[%c0_40, %c0_41], %78 {strides = array<i32>} : memref<1x1xf32, #tpu.memory_space<vmem>>, vector<1x1xf32>,
      %cst_42 = arith.constant 0.000000e+00 : f32
      %80 = vector.broadcast %cst_42 : f32 to vector<1x128xf32>
      %c0_43 = arith.constant 0 : index
      %c0_44 = arith.constant 0 : index
      %81 = vector.load %arg15[%c0_43, %c0_44] : memref<1x128xf32, #tpu.memory_space<vmem>>, vector<1x128xf32>
      tpu.vector_store %arg15[%c0_43, %c0_44], %80 {strides = array<i32>} : memref<1x128xf32, #tpu.memory_space<vmem>>, vector<1x128xf32>,
    } else {
    }
    %c0 = arith.constant 0 : index
    %c0_1 = arith.constant 0 : index
    %3 = vector.load %arg3[%c0, %c0_1] : memref<64x64xbf16, #tpu.memory_space<vmem>>, vector<64x64xbf16>
    %c0_2 = arith.constant 0 : index
    %c0_3 = arith.constant 0 : index
    %4 = vector.load %arg4[%c0_2, %c0_3] : memref<64x128xbf16, #tpu.memory_space<vmem>>, vector<64x128xbf16>
    %cst = arith.constant dense<0.000000e+00> : vector<64x128xf32>
    %5 = tpu.matmul %3, %4, %cst {dimension_numbers = #tpu.dot_dimension_numbers<[1], [0], [0], [1], [0, 0, 1, 1], [], []>} : vector<64x64xbf16>, vector<64x128xbf16>, vector<64x128xf32> -> vector<64x128xf32>
    %c0_4 = arith.constant 0 : index
    %c0_5 = arith.constant 0 : index
    %6 = vector.load %arg5[%c0_4, %c0_5] : memref<1x128xf32, #tpu.memory_space<vmem>>, vector<1x128xf32>
    %7 = vector.broadcast %6 : vector<1x128xf32> to vector<64x128xf32>
    %8 = arith.addf %5, %7 : vector<64x128xf32>
    %cst_6 = arith.constant 0.000000e+00 : f32
    %9 = vector.broadcast %cst_6 : f32 to vector<64x128xf32>
    %10 = arith.maximumf %8, %9 : vector<64x128xf32>
    %11 = arith.truncf %10 : vector<64x128xf32> to vector<64x128xbf16>
    %c0_7 = arith.constant 0 : index
    %c0_8 = arith.constant 0 : index
    %12 = vector.load %arg6[%c0_7, %c0_8] : memref<128x256xbf16, #tpu.memory_space<vmem>>, vector<128x256xbf16>
    %cst_9 = arith.constant dense<0.000000e+00> : vector<64x256xf32>
    %13 = tpu.matmul %11, %12, %cst_9 {dimension_numbers = #tpu.dot_dimension_numbers<[1], [0], [0], [1], [0, 0, 1, 1], [], []>} : vector<64x128xbf16>, vector<128x256xbf16>, vector<64x256xf32> -> vector<64x256xf32>
    %c0_10 = arith.constant 0 : index
    %c0_11 = arith.constant 0 : index
    %14 = vector.load %arg7[%c0_10, %c0_11] : memref<1x256xf32, #tpu.memory_space<vmem>>, vector<1x256xf32>
    %15 = vector.broadcast %14 : vector<1x256xf32> to vector<64x256xf32>
    %16 = arith.addf %13, %15 : vector<64x256xf32>
    %17 = vector.extract_strided_slice %16 {offsets = [0, 0], sizes = [64, 128], strides = [1, 1]} : vector<64x256xf32> to vector<64x128xf32>
    %18 = math.tanh %17 : vector<64x128xf32>
    %19 = vector.extract_strided_slice %16 {offsets = [0, 128], sizes = [64, 128], strides = [1, 1]} : vector<64x256xf32> to vector<64x128xf32>
    %20 = arith.negf %19 : vector<64x128xf32>
    %21 = math.exp %20 : vector<64x128xf32>
    %cst_12 = arith.constant 1.000000e+00 : f32
    %22 = vector.broadcast %cst_12 : f32 to vector<64x128xf32>
    %23 = arith.addf %22, %21 : vector<64x128xf32>
    %24 = arith.divf %22, %23 : vector<64x128xf32>
    %25 = arith.mulf %18, %24 : vector<64x128xf32>
    %c0_13 = arith.constant 0 : index
    %c0_14 = arith.constant 0 : index
    %26 = vector.load %arg8[%c0_13, %c0_14] : memref<1x128xf32, #tpu.memory_space<vmem>>, vector<1x128xf32>
    %27 = vector.broadcast %26 : vector<1x128xf32> to vector<64x128xf32>
    %28 = arith.mulf %25, %27 : vector<64x128xf32>
    %cst_15 = arith.constant dense<0.000000e+00> : vector<64xf32>
    %29 = vector.multi_reduction <add>, %28, %cst_15 [1] : vector<64x128xf32> to vector<64xf32>
    %30 = vector.shape_cast %29 : vector<64xf32> to vector<64x1xf32>
    %c0_16 = arith.constant 0 : index
    %c0_17 = arith.constant 0 : index
    %31 = vector.load %arg9[%c0_16, %c0_17] : memref<1x1xf32, #tpu.memory_space<vmem>>, vector<1x1xf32>
    %32 = vector.broadcast %31 : vector<1x1xf32> to vector<64x1xf32>
    %33 = arith.addf %30, %32 : vector<64x1xf32>
    %c2_i32 = arith.constant 2 : i32
    %34 = arith.muli %arg0, %c2_i32 : i32
    %35 = arith.addi %34, %arg1 : i32
    %c64_i32 = arith.constant 64 : i32
    %36 = arith.muli %35, %c64_i32 : i32
    %37 = tpu.iota {dimensions = array<i32: 0>} : vector<64x1xi32>
    %38 = vector.broadcast %36 : i32 to vector<64x1xi32>
    %39 = arith.addi %38, %37 : vector<64x1xi32>
    %c0_18 = arith.constant 0 : index
    %40 = memref.load %arg2[%c0_18] : memref<1xi32, #tpu.memory_space<smem>>
    %41 = vector.broadcast %40 : i32 to vector<64x1xi32>
    %42 = arith.cmpi slt, %39, %41 : vector<64x1xi32>
    %cst_19 = arith.constant -1.000000e+30 : f32
    %43 = vector.broadcast %cst_19 : f32 to vector<64x1xf32>
    %44 = arith.select %42, %33, %43 : vector<64x1xi1>, vector<64x1xf32>
    %c0_20 = arith.constant 0 : index
    %c0_21 = arith.constant 0 : index
    %45 = vector.load %arg13[%c0_20, %c0_21] : memref<1x1xf32, #tpu.memory_space<vmem>>, vector<1x1xf32>
    %46 = vector.shape_cast %44 : vector<64x1xf32> to vector<1x64x1xf32>
    %cst_22 = arith.constant dense<0xFF800000> : vector<1xf32>
    %47 = vector.multi_reduction <maximumf>, %46, %cst_22 [1, 2] : vector<1x64x1xf32> to vector<1xf32>
    %48 = vector.shape_cast %47 : vector<1xf32> to vector<1x1x1xf32>
    %49 = vector.extract %48[0, 0, 0] : f32 from vector<1x1x1xf32>
    %50 = vector.broadcast %49 : f32 to vector<1x1xf32>
    %51 = arith.maximumf %45, %50 : vector<1x1xf32>
    %52 = arith.subf %45, %51 : vector<1x1xf32>
    %53 = math.exp %52 : vector<1x1xf32>
    %54 = vector.broadcast %51 : vector<1x1xf32> to vector<64x1xf32>
    %55 = arith.subf %44, %54 : vector<64x1xf32>
    %56 = math.exp %55 : vector<64x1xf32>
    %c0_23 = arith.constant 0 : index
    %c0_24 = arith.constant 0 : index
    %57 = vector.load %arg14[%c0_23, %c0_24] : memref<1x1xf32, #tpu.memory_space<vmem>>, vector<1x1xf32>
    %58 = arith.mulf %53, %57 : vector<1x1xf32>
    %59 = vector.shape_cast %56 : vector<64x1xf32> to vector<1x64x1xf32>
    %cst_25 = arith.constant dense<0.000000e+00> : vector<1xf32>
    %60 = vector.multi_reduction <add>, %59, %cst_25 [1, 2] : vector<1x64x1xf32> to vector<1xf32>
    %61 = vector.shape_cast %60 : vector<1xf32> to vector<1x1x1xf32>
    %62 = vector.extract %61[0, 0, 0] : f32 from vector<1x1x1xf32>
    %63 = vector.broadcast %62 : f32 to vector<1x1xf32>
    %64 = arith.addf %58, %63 : vector<1x1xf32>
    %c0_26 = arith.constant 0 : index
    %c0_27 = arith.constant 0 : index
    %65 = vector.load %arg14[%c0_26, %c0_27] : memref<1x1xf32, #tpu.memory_space<vmem>>, vector<1x1xf32>
    tpu.vector_store %arg14[%c0_26, %c0_27], %64 {strides = array<i32>} : memref<1x1xf32, #tpu.memory_space<vmem>>, vector<1x1xf32>,
    %c0_28 = arith.constant 0 : index
    %c0_29 = arith.constant 0 : index
    %66 = vector.load %arg15[%c0_28, %c0_29] : memref<1x128xf32, #tpu.memory_space<vmem>>, vector<1x128xf32>
    %67 = vector.broadcast %53 : vector<1x1xf32> to vector<1x128xf32>
    %68 = arith.mulf %67, %66 : vector<1x128xf32>
    %cst_30 = arith.constant dense<0.000000e+00> : vector<1x128xf32>
    %69 = tpu.matmul %56, %10, %cst_30 {dimension_numbers = #tpu.dot_dimension_numbers<[0], [0], [1], [1], [0, 1, 1, 1], [], []>} : vector<64x1xf32>, vector<64x128xf32>, vector<1x128xf32> -> vector<1x128xf32>
    %70 = arith.addf %68, %69 : vector<1x128xf32>
    %c0_31 = arith.constant 0 : index
    %c0_32 = arith.constant 0 : index
    %71 = vector.load %arg15[%c0_31, %c0_32] : memref<1x128xf32, #tpu.memory_space<vmem>>, vector<1x128xf32>
    tpu.vector_store %arg15[%c0_31, %c0_32], %70 {strides = array<i32>} : memref<1x128xf32, #tpu.memory_space<vmem>>, vector<1x128xf32>,
    %c0_33 = arith.constant 0 : index
    %c0_34 = arith.constant 0 : index
    %72 = vector.load %arg13[%c0_33, %c0_34] : memref<1x1xf32, #tpu.memory_space<vmem>>, vector<1x1xf32>
    tpu.vector_store %arg13[%c0_33, %c0_34], %51 {strides = array<i32>} : memref<1x1xf32, #tpu.memory_space<vmem>>, vector<1x1xf32>,
    %c1_i32 = arith.constant 1 : i32
    %73 = arith.cmpi eq, %arg1, %c1_i32 : i32
    %74 = arith.extui %73 : i1 to i32
    %c0_i32_35 = arith.constant 0 : i32
    %75 = arith.cmpi ne, %74, %c0_i32_35 : i32
    scf.if %75 {
      %c0_36 = arith.constant 0 : index
      %c0_37 = arith.constant 0 : index
      %76 = vector.load %arg13[%c0_36, %c0_37] : memref<1x1xf32, #tpu.memory_space<vmem>>, vector<1x1xf32>
      %c0_38 = arith.constant 0 : index
      %c0_39 = arith.constant 0 : index
      %c0_40 = arith.constant 0 : index
      %77 = vector.load %arg10[%c0_38, %c0_39, %c0_40] : memref<1x1x1xf32, #tpu.memory_space<vmem>>, vector<1x1x1xf32>
      %78 = vector.shape_cast %77 : vector<1x1x1xf32> to vector<1x1xf32>
      %79 = vector.shape_cast %76 : vector<1x1xf32> to vector<1x1x1xf32>
      tpu.vector_store %arg10[%c0_38, %c0_39, %c0_40], %79 {strides = array<i32>} : memref<1x1x1xf32, #tpu.memory_space<vmem>>, vector<1x1x1xf32>,
      %c0_41 = arith.constant 0 : index
      %c0_42 = arith.constant 0 : index
      %80 = vector.load %arg14[%c0_41, %c0_42] : memref<1x1xf32, #tpu.memory_space<vmem>>, vector<1x1xf32>
      %c0_43 = arith.constant 0 : index
      %c0_44 = arith.constant 0 : index
      %c0_45 = arith.constant 0 : index
      %81 = vector.load %arg11[%c0_43, %c0_44, %c0_45] : memref<1x1x1xf32, #tpu.memory_space<vmem>>, vector<1x1x1xf32>
      %82 = vector.shape_cast %81 : vector<1x1x1xf32> to vector<1x1xf32>
      %83 = vector.shape_cast %80 : vector<1x1xf32> to vector<1x1x1xf32>
      tpu.vector_store %arg11[%c0_43, %c0_44, %c0_45], %83 {strides = array<i32>} : memref<1x1x1xf32, #tpu.memory_space<vmem>>, vector<1x1x1xf32>,
      %c0_46 = arith.constant 0 : index
      %c0_47 = arith.constant 0 : index
      %84 = vector.load %arg15[%c0_46, %c0_47] : memref<1x128xf32, #tpu.memory_space<vmem>>, vector<1x128xf32>
      %c0_48 = arith.constant 0 : index
      %c0_49 = arith.constant 0 : index
      %c0_50 = arith.constant 0 : index
      %85 = vector.load %arg12[%c0_48, %c0_49, %c0_50] : memref<1x1x128xf32, #tpu.memory_space<vmem>>, vector<1x1x128xf32>
      %86 = vector.shape_cast %85 : vector<1x1x128xf32> to vector<1x128xf32>
      %87 = vector.shape_cast %84 : vector<1x128xf32> to vector<1x1x128xf32>
      tpu.vector_store %arg12[%c0_48, %c0_49, %c0_50], %87 {strides = array<i32>} : memref<1x1x128xf32, #tpu.memory_space<vmem>>, vector<1x1x128xf32>,
    } else {
    }
    return
  }
  func.func @transform_0(%arg0: i32, %arg1: i32, %arg2: memref<1xi32, #tpu.memory_space<smem>>) -> (i32, i32) {
    %c2_i32 = arith.constant 2 : i32
    %0 = arith.muli %arg0, %c2_i32 : i32
    %1 = arith.addi %0, %arg1 : i32
    %c0_i32 = arith.constant 0 : i32
    %c0_i32_0 = arith.constant 0 : i32
    return %1, %c0_i32 : i32, i32
  }
  func.func @transform_1(%arg0: i32, %arg1: i32, %arg2: memref<1xi32, #tpu.memory_space<smem>>) -> (i32, i32) {
    %c0_i32 = arith.constant 0 : i32
    %c0_i32_0 = arith.constant 0 : i32
    %c0_i32_1 = arith.constant 0 : i32
    return %c0_i32, %c0_i32_0 : i32, i32
  }
  func.func @transform_2(%arg0: i32, %arg1: i32, %arg2: memref<1xi32, #tpu.memory_space<smem>>) -> (i32, i32) {
    %c0_i32 = arith.constant 0 : i32
    %c0_i32_0 = arith.constant 0 : i32
    %c0_i32_1 = arith.constant 0 : i32
    return %c0_i32, %c0_i32_0 : i32, i32
  }
  func.func @transform_3(%arg0: i32, %arg1: i32, %arg2: memref<1xi32, #tpu.memory_space<smem>>) -> (i32, i32) {
    %c0_i32 = arith.constant 0 : i32
    %c0_i32_0 = arith.constant 0 : i32
    %c0_i32_1 = arith.constant 0 : i32
    return %c0_i32, %c0_i32_0 : i32, i32
  }
  func.func @transform_4(%arg0: i32, %arg1: i32, %arg2: memref<1xi32, #tpu.memory_space<smem>>) -> (i32, i32) {
    %c0_i32 = arith.constant 0 : i32
    %c0_i32_0 = arith.constant 0 : i32
    %c0_i32_1 = arith.constant 0 : i32
    return %c0_i32, %c0_i32_0 : i32, i32
  }
  func.func @transform_5(%arg0: i32, %arg1: i32, %arg2: memref<1xi32, #tpu.memory_space<smem>>) -> (i32, i32) {
    %c0_i32 = arith.constant 0 : i32
    %c0_i32_0 = arith.constant 0 : i32
    %c0_i32_1 = arith.constant 0 : i32
    return %c0_i32, %c0_i32_0 : i32, i32
  }
  func.func @transform_6(%arg0: i32, %arg1: i32, %arg2: memref<1xi32, #tpu.memory_space<smem>>) -> (i32, i32) {
    %c0_i32 = arith.constant 0 : i32
    %c0_i32_0 = arith.constant 0 : i32
    %c0_i32_1 = arith.constant 0 : i32
    return %c0_i32, %c0_i32_0 : i32, i32
  }
  func.func @transform_7(%arg0: i32, %arg1: i32, %arg2: memref<1xi32, #tpu.memory_space<smem>>) -> (i32, i32, i32) {
    %c0_i32 = arith.constant 0 : i32
    %c0_i32_0 = arith.constant 0 : i32
    %c0_i32_1 = arith.constant 0 : i32
    return %arg0, %c0_i32, %c0_i32_0 : i32, i32, i32
  }
  func.func @transform_8(%arg0: i32, %arg1: i32, %arg2: memref<1xi32, #tpu.memory_space<smem>>) -> (i32, i32, i32) {
    %c0_i32 = arith.constant 0 : i32
    %c0_i32_0 = arith.constant 0 : i32
    %c0_i32_1 = arith.constant 0 : i32
    return %arg0, %c0_i32, %c0_i32_0 : i32, i32, i32
  }
  func.func @transform_9(%arg0: i32, %arg1: i32, %arg2: memref<1xi32, #tpu.memory_space<smem>>) -> (i32, i32, i32) {
    %c0_i32 = arith.constant 0 : i32
    %c0_i32_0 = arith.constant 0 : i32
    %c0_i32_1 = arith.constant 0 : i32
    return %arg0, %c0_i32, %c0_i32_0 : i32, i32, i32
  }
}

</mosaic_0001>

<llo_original>
// kernel: tpu_custom_call.1
$region0: #{tpu_custom_call.1}
  #allocation0 [shape = 'u32[]', space=smem, size = 0x4, offset = 0x4, fixed_abs, tag = 'smem constant byte address 0x4 - core index']
  #allocation1 [shape = 'u32[144,128]{1,0:T(1,128)}', space=vmem, size = 0x12000, scoped, tag = 'internal scratch']
  #allocation2 [shape = 'f32[1,1]{1,0:T(1,128)}', space=vmem, size = 0x200, scoped, tag = 'scratch operand']
  #allocation3 [shape = 'f32[1,1]{1,0:T(1,128)}', space=vmem, size = 0x200, scoped, tag = 'scratch operand']
  #allocation4 [shape = 'f32[1,128]{1,0:T(1,128)}', space=vmem, size = 0x200, scoped, tag = 'scratch operand']
  #allocation5 [shape = 's32[1]{0}', space=sflag, size = 0x4, scoped, tag = 'scoped memory for tpu_custom_call.1']
  #allocation6 [shape = 's32[1]{0:T(128)S(6)}', space=smem, size = 0x200, scoped, tag = 'prefetched SMEM operand 0']
  #allocation7 [shape = 'f32[1,1]{1,0:T(1,128)S(1)}', space=vmem, size = 0x200, scoped, tag = 'scoped memory for tpu_custom_call.1']
  %s0 = inlined_call_operand.<no memory space> [shape: s32[1], index: 0, kind: input, shape index: {}]
  %s1 = inlined_call_operand.vmem [shape: bf16[256,64], index: 1, kind: input, shape index: {}]
  %s2 = inlined_call_operand.vmem [shape: bf16[64,128], index: 2, kind: input, shape index: {}]
  %s3 = inlined_call_operand.vmem [shape: f32[1,128], index: 3, kind: input, shape index: {}]
  %s4 = inlined_call_operand.vmem [shape: bf16[128,256], index: 4, kind: input, shape index: {}]
  %s5 = inlined_call_operand.vmem [shape: f32[1,256], index: 5, kind: input, shape index: {}]
  %s6 = inlined_call_operand.vmem [shape: f32[1,128], index: 6, kind: input, shape index: {}]
  %s7 = inlined_call_operand.<no memory space> [shape: f32[1,1], index: 7, kind: input, shape index: {}]
  %s8 = inlined_call_operand.vmem [shape: f32[2,1,1], index: 8, kind: output, shape index: {0}]
  %s9 = inlined_call_operand.vmem [shape: f32[2,1,1], index: 9, kind: output, shape index: {1}]
  %s10 = inlined_call_operand.hbm [shape: f32[2,1,128], index: 10, kind: output, shape index: {2}]
  %11 = xla_tuple %s8, %s9, %s10
  %s12 = sld [smem:[#allocation0]]
  $region85: #{tpu_custom_call.1} parent=0
    _
  %s14 = ssub.s32 1, %s12
  %s15 = scalar_select 0, %s14, %s12
  %16 = sst [smem:[#allocation6]] %s0
  %v17 = vstv %s7
  %18 = vst [vmem:[#allocation7] sm:$0x1] %v17
  $region1: #{tpu_custom_call.1} parent=0
    #allocation8 [shape = 'u8[1024]{0}', space=vmem, size = 0x400, scoped, tag = 'output window, operand 2']
    #allocation9 [shape = 's32[2]{0}', space=sflag, size = 0x8, scoped, tag = 'scoped memory for tpu_custom_call.1']
    %19 = vsyncpa [#allocation9], 0
    %s20 = scalar_lea.sflag [#allocation9], 1
    %21 = vsyncpa %s20, 0
    loop: start=0, step=1, limit=6
    $region2: #{tpu_custom_call.1} parent=1 // loop_pre_header
      _
    $region3: #{tpu_custom_call.1} parent=1 // loop_header
      %s23 = sphi 0, %s27
      %p24 = scmp.ge.s32.totalorder %s23, 6
      %s30 = sphi 0, %s42
      %s31 = sphi 0, %s38
      %s32 = sphi 0, %s30
      %s33 = sphi 0, %s31
      %s34 = sphi 0, %s32
      %s35 = sphi 0, %s33
      %s49 = sphi 0, %s51
      %s52 = sphi 0, %s49
      %s53 = sphi 0, %s52
      %s69 = sphi 0, %s53
      %s73 = sphi 0, %s73
      %s75 = sphi 0, %s73
      %s76 = sphi 0, %s75
      %s90 = sphi 0, %s76
      %s94 = sphi 0, %s94
      %s96 = sphi 0, %s94
      %s97 = sphi 0, %s96
      %s111 = sphi 0, %s97
      %s115 = sphi 0, %s115
      %s117 = sphi 0, %s115
      %s118 = sphi 0, %s117
      %s132 = sphi 0, %s118
      %s136 = sphi 0, %s136
      %s138 = sphi 0, %s136
      %s139 = sphi 0, %s138
      %s153 = sphi 0, %s139
      %s157 = sphi 0, %s157
      %s159 = sphi 0, %s157
      %s160 = sphi 0, %s159
      %s174 = sphi 0, %s160
      %s178 = sphi 0, %s178
      %s180 = sphi 0, %s178
      %s181 = sphi 0, %s180
      %s195 = sphi 0, %s181
      %s201 = sphi 0, %s203
      %s204 = sphi 0, %s201
      %s205 = sphi 0, %s204
      %s221 = sphi 0, %s205
      %s227 = sphi 0, %s229
      %s230 = sphi 0, %s227
      %s231 = sphi 0, %s230
      %s247 = sphi 0, %s231
      %s253 = sphi 0, %s255
      %s256 = sphi 0, %s253
      %s257 = sphi 0, %s256
      %s273 = sphi 0, %s257
    $region4: #{tpu_custom_call.1} parent=1 // loop_header_branch
      %26 = sbr.rel (%p24) target = $region8
    $region5: #{tpu_custom_call.1} parent=1 // loop_body
      %s28 = ssub.s32 %s23, 1
      %s29 = ssub.s32 %s23, 2
      %s36 = sadd.s32 1, %s31
      %p37 = scmp.ge.s32.totalorder %s36, 2
      %s38 = scalar_select %p37, 0, %s36
      %s39 = sadd.s32 1, %s30
      %s40 = scalar_select %p37, %s39, %s30
      %p41 = scmp.ge.s32.totalorder %s40, 2
      %s42 = scalar_select %p41, 0, %s40
      %s43 = smul.u32 %s30, 2
      %s44 = sadd.s32 %s43, %s31
      %s45 = smul.u32 %s42, 2
      %s46 = sadd.s32 %s45, %s38
      %s47 = ssub.s32 %s44, %s46
      %p48 = scmp.eq.s32.totalorder %s47, 0
      %s50 = sadd.s32 %s49, 1
      %s51 = scalar_select %p48, %s49, %s50
      %p54 = pneg %p48
      %p55 = scmp.eq.s32.totalorder %s23, 3
      %p56 = por %p54, %p55
      %p57 = scmp.ne.s32.totalorder %s49, %s52
      %p58 = scmp.eq.s32.totalorder %s23, 0
      %p59 = por %p57, %p58
      %p60 = scmp.ne.s32.totalorder %s49, %s52
      %p61 = scmp.eq.s32.totalorder %s28, 3
      %p62 = por %p60, %p61
      %p63 = scmp.ne.s32.totalorder %s52, %s53
      %p64 = scmp.eq.s32.totalorder %s28, 0
      %p65 = por %p63, %p64
      %p66 = scmp.ne.s32.totalorder %s52, %s53
      %p67 = scmp.eq.s32.totalorder %s29, 3
      %p68 = por %p66, %p67
      %p70 = scmp.ne.s32.totalorder %s53, %s69
      %p71 = scmp.eq.s32.totalorder %s29, 0
      %p72 = por %p70, %p71
      %s74 = sadd.s32 %s73, 1
      %p77 = scmp.eq.s32.totalorder %s23, 3
      %p78 = scmp.ne.s32.totalorder %s73, %s75
      %p79 = scmp.eq.s32.totalorder %s23, 0
      %p80 = por %p78, %p79
      %p81 = scmp.ne.s32.totalorder %s73, %s75
      %p82 = scmp.eq.s32.totalorder %s28, 3
      %p83 = por %p81, %p82
      %p84 = scmp.ne.s32.totalorder %s75, %s76
      %p85 = scmp.eq.s32.totalorder %s28, 0
      %p86 = por %p84, %p85
      %p87 = scmp.ne.s32.totalorder %s75, %s76
      %p88 = scmp.eq.s32.totalorder %s29, 3
      %p89 = por %p87, %p88
      %p91 = scmp.ne.s32.totalorder %s76, %s90
      %p92 = scmp.eq.s32.totalorder %s29, 0
      %p93 = por %p91, %p92
      %s95 = sadd.s32 %s94, 1
      %p98 = scmp.eq.s32.totalorder %s23, 3
      %p99 = scmp.ne.s32.totalorder %s94, %s96
      %p100 = scmp.eq.s32.totalorder %s23, 0
      %p101 = por %p99, %p100
      %p102 = scmp.ne.s32.totalorder %s94, %s96
      %p103 = scmp.eq.s32.totalorder %s28, 3
      %p104 = por %p102, %p103
      %p105 = scmp.ne.s32.totalorder %s96, %s97
      %p106 = scmp.eq.s32.totalorder %s28, 0
      %p107 = por %p105, %p106
      %p108 = scmp.ne.s32.totalorder %s96, %s97
      %p109 = scmp.eq.s32.totalorder %s29, 3
      %p110 = por %p108, %p109
      %p112 = scmp.ne.s32.totalorder %s97, %s111
      %p113 = scmp.eq.s32.totalorder %s29, 0
      %p114 = por %p112, %p113
      %s116 = sadd.s32 %s115, 1
      %p119 = scmp.eq.s32.totalorder %s23, 3
      %p120 = scmp.ne.s32.totalorder %s115, %s117
      %p121 = scmp.eq.s32.totalorder %s23, 0
      %p122 = por %p120, %p121
      %p123 = scmp.ne.s32.totalorder %s115, %s117
      %p124 = scmp.eq.s32.totalorder %s28, 3
      %p125 = por %p123, %p124
      %p126 = scmp.ne.s32.totalorder %s117, %s118
      %p127 = scmp.eq.s32.totalorder %s28, 0
      %p128 = por %p126, %p127
      %p129 = scmp.ne.s32.totalorder %s117, %s118
      %p130 = scmp.eq.s32.totalorder %s29, 3
      %p131 = por %p129, %p130
      %p133 = scmp.ne.s32.totalorder %s118, %s132
      %p134 = scmp.eq.s32.totalorder %s29, 0
      %p135 = por %p133, %p134
      %s137 = sadd.s32 %s136, 1
      %p140 = scmp.eq.s32.totalorder %s23, 3
      %p141 = scmp.ne.s32.totalorder %s136, %s138
      %p142 = scmp.eq.s32.totalorder %s23, 0
      %p143 = por %p141, %p142
      %p144 = scmp.ne.s32.totalorder %s136, %s138
      %p145 = scmp.eq.s32.totalorder %s28, 3
      %p146 = por %p144, %p145
      %p147 = scmp.ne.s32.totalorder %s138, %s139
      %p148 = scmp.eq.s32.totalorder %s28, 0
      %p149 = por %p147, %p148
      %p150 = scmp.ne.s32.totalorder %s138, %s139
      %p151 = scmp.eq.s32.totalorder %s29, 3
      %p152 = por %p150, %p151
      %p154 = scmp.ne.s32.totalorder %s139, %s153
      %p155 = scmp.eq.s32.totalorder %s29, 0
      %p156 = por %p154, %p155
      %s158 = sadd.s32 %s157, 1
      %p161 = scmp.eq.s32.totalorder %s23, 3
      %p162 = scmp.ne.s32.totalorder %s157, %s159
      %p163 = scmp.eq.s32.totalorder %s23, 0
      %p164 = por %p162, %p163
      %p165 = scmp.ne.s32.totalorder %s157, %s159
      %p166 = scmp.eq.s32.totalorder %s28, 3
      %p167 = por %p165, %p166
      %p168 = scmp.ne.s32.totalorder %s159, %s160
      %p169 = scmp.eq.s32.totalorder %s28, 0
      %p170 = por %p168, %p169
      %p171 = scmp.ne.s32.totalorder %s159, %s160
      %p172 = scmp.eq.s32.totalorder %s29, 3
      %p173 = por %p171, %p172
      %p175 = scmp.ne.s32.totalorder %s160, %s174
      %p176 = scmp.eq.s32.totalorder %s29, 0
      %p177 = por %p175, %p176
      %s179 = sadd.s32 %s178, 1
      %p182 = scmp.eq.s32.totalorder %s23, 3
      %p183 = scmp.ne.s32.totalorder %s178, %s180
      %p184 = scmp.eq.s32.totalorder %s23, 0
      %p185 = por %p183, %p184
      %p186 = scmp.ne.s32.totalorder %s178, %s180
      %p187 = scmp.eq.s32.totalorder %s28, 3
      %p188 = por %p186, %p187
      %p189 = scmp.ne.s32.totalorder %s180, %s181
      %p190 = scmp.eq.s32.totalorder %s28, 0
      %p191 = por %p189, %p190
      %p192 = scmp.ne.s32.totalorder %s180, %s181
      %p193 = scmp.eq.s32.totalorder %s29, 3
      %p194 = por %p192, %p193
      %p196 = scmp.ne.s32.totalorder %s181, %s195
      %p197 = scmp.eq.s32.totalorder %s29, 0
      %p198 = por %p196, %p197
      %s199 = ssub.s32 %s30, %s42
      %p200 = scmp.eq.s32.totalorder %s199, 0
      %s202 = sadd.s32 %s201, 1
      %s203 = scalar_select %p200, %s201, %s202
      %p206 = pneg %p200
      %p207 = scmp.eq.s32.totalorder %s23, 3
      %p208 = por %p206, %p207
      %p209 = scmp.ne.s32.totalorder %s201, %s204
      %p210 = scmp.eq.s32.totalorder %s23, 0
      %p211 = por %p209, %p210
      %p212 = scmp.ne.s32.totalorder %s201, %s204
      %p213 = scmp.eq.s32.totalorder %s28, 3
      %p214 = por %p212, %p213
      %p215 = scmp.ne.s32.totalorder %s204, %s205
      %p216 = scmp.eq.s32.totalorder %s28, 0
      %p217 = por %p215, %p216
      %p218 = scmp.ne.s32.totalorder %s204, %s205
      %p219 = scmp.eq.s32.totalorder %s29, 3
      %p220 = por %p218, %p219
      %p222 = scmp.ne.s32.totalorder %s205, %s221
      %p223 = scmp.eq.s32.totalorder %s29, 0
      %p224 = por %p222, %p223
      %s225 = ssub.s32 %s30, %s42
      %p226 = scmp.eq.s32.totalorder %s225, 0
      %s228 = sadd.s32 %s227, 1
      %s229 = scalar_select %p226, %s227, %s228
      %p232 = pneg %p226
      %p233 = scmp.eq.s32.totalorder %s23, 3
      %p234 = por %p232, %p233
      %p235 = scmp.ne.s32.totalorder %s227, %s230
      %p236 = scmp.eq.s32.totalorder %s23, 0
      %p237 = por %p235, %p236
      %p238 = scmp.ne.s32.totalorder %s227, %s230
      %p239 = scmp.eq.s32.totalorder %s28, 3
      %p240 = por %p238, %p239
      %p241 = scmp.ne.s32.totalorder %s230, %s231
      %p242 = scmp.eq.s32.totalorder %s28, 0
      %p243 = por %p241, %p242
      %p244 = scmp.ne.s32.totalorder %s230, %s231
      %p245 = scmp.eq.s32.totalorder %s29, 3
      %p246 = por %p244, %p245
      %p248 = scmp.ne.s32.totalorder %s231, %s247
      %p249 = scmp.eq.s32.totalorder %s29, 0
      %p250 = por %p248, %p249
      %s251 = ssub.s32 %s30, %s42
      %p252 = scmp.eq.s32.totalorder %s251, 0
      %s254 = sadd.s32 %s253, 1
      %s255 = scalar_select %p252, %s253, %s254
      %p258 = pneg %p252
      %p259 = scmp.eq.s32.totalorder %s23, 3
      %p260 = por %p258, %p259
      %p261 = scmp.ne.s32.totalorder %s253, %s256
      %p262 = scmp.eq.s32.totalorder %s23, 0
      %p263 = por %p261, %p262
      %p264 = scmp.ne.s32.totalorder %s253, %s256
      %p265 = scmp.eq.s32.totalorder %s28, 3
      %p266 = por %p264, %p265
      %p267 = scmp.ne.s32.totalorder %s256, %s257
      %p268 = scmp.eq.s32.totalorder %s28, 0
      %p269 = por %p267, %p268
      %p270 = scmp.ne.s32.totalorder %s256, %s257
      %p271 = scmp.eq.s32.totalorder %s29, 3
      %p272 = por %p270, %p271
      %p274 = scmp.ne.s32.totalorder %s257, %s273
      %p275 = scmp.eq.s32.totalorder %s29, 0
      %p276 = por %p274, %p275
      %p277 = scmp.le.s32.totalorder 1, %s23
      %p278 = scmp.lt.s32.totalorder %s23, 5
      %p279 = pnand %p277, %p278
      %p280 = pneg %p279
      // Predicated region
      $region9: #{tpu_custom_call.1} parent=5 // pred_check
        _
      $region10: #{tpu_custom_call.1} parent=5 // pred_check_branch
        %282 = sbr.rel (%p279) target = $region12
      $region11: #{tpu_custom_call.1} parent=5 // pred_region
        %s283 = ssub.s32 %s23, 1
        // Predicated region
        $region13: #{tpu_custom_call.1} parent=11 // pred_check
          %p284 = pneg %p86
        $region14: #{tpu_custom_call.1} parent=11 // pred_check_branch
          %286 = sbr.rel (%p284) target = $region16
        $region15: #{tpu_custom_call.1} parent=11 // pred_region
          _
        $region16: #{tpu_custom_call.1} parent=11 // pred_fallthru
          _
        // Predicated region
        $region17: #{tpu_custom_call.1} parent=11 // pred_check
          %p287 = pneg %p107
        $region18: #{tpu_custom_call.1} parent=11 // pred_check_branch
          %289 = sbr.rel (%p287) target = $region20
        $region19: #{tpu_custom_call.1} parent=11 // pred_region
          _
        $region20: #{tpu_custom_call.1} parent=11 // pred_fallthru
          _
        // Predicated region
        $region21: #{tpu_custom_call.1} parent=11 // pred_check
          %p290 = pneg %p128
        $region22: #{tpu_custom_call.1} parent=11 // pred_check_branch
          %292 = sbr.rel (%p290) target = $region24
        $region23: #{tpu_custom_call.1} parent=11 // pred_region
          _
        $region24: #{tpu_custom_call.1} parent=11 // pred_fallthru
          _
        // Predicated region
        $region25: #{tpu_custom_call.1} parent=11 // pred_check
          %p293 = pneg %p149
        $region26: #{tpu_custom_call.1} parent=11 // pred_check_branch
          %295 = sbr.rel (%p293) target = $region28
        $region27: #{tpu_custom_call.1} parent=11 // pred_region
          _
        $region28: #{tpu_custom_call.1} parent=11 // pred_fallthru
          _
        // Predicated region
        $region29: #{tpu_custom_call.1} parent=11 // pred_check
          %p296 = pneg %p170
        $region30: #{tpu_custom_call.1} parent=11 // pred_check_branch
          %298 = sbr.rel (%p296) target = $region32
        $region31: #{tpu_custom_call.1} parent=11 // pred_region
          _
        $region32: #{tpu_custom_call.1} parent=11 // pred_fallthru
          _
        // Predicated region
        $region33: #{tpu_custom_call.1} parent=11 // pred_check
          %p299 = pneg %p191
        $region34: #{tpu_custom_call.1} parent=11 // pred_check_branch
          %301 = sbr.rel (%p299) target = $region36
        $region35: #{tpu_custom_call.1} parent=11 // pred_region
          _
        $region36: #{tpu_custom_call.1} parent=11 // pred_fallthru
          _
      $region12: #{tpu_custom_call.1} parent=5 // pred_fallthru
        _
      %p302 = scmp.lt.s32.totalorder %s23, 4
      // Predicated region
      $region37: #{tpu_custom_call.1} parent=5 // pred_check
        %p303 = pneg %p302
      $region38: #{tpu_custom_call.1} parent=5 // pred_check_branch
        %305 = sbr.rel (%p303) target = $region40
      $region39: #{tpu_custom_call.1} parent=5 // pred_region
        // Predicated region
        $region41: #{tpu_custom_call.1} parent=39 // pred_check
          %p306 = pneg %p59
        $region42: #{tpu_custom_call.1} parent=39 // pred_check_branch
          %308 = sbr.rel (%p306) target = $region44
        $region43: #{tpu_custom_call.1} parent=39 // pred_region
          %s309 = smul.u32 %s30, 2
          %s310 = sadd.s32 %s309, %s31
          %s311 = smul.u32 8, %s310
          %p312 = scmp.lt.s32.totalorder %s311, 31
          %s313 = scalar_select %p312, %s311, 31
          %s314 = smul.addr %s313, 4
          %s315 = scalar_lea.vmem %s1, %s314
          %s316 = smul.u32 %s30, 2
          %s317 = sadd.s32 %s316, %s31
          %s318 = smul.u32 8, %s317
        $region44: #{tpu_custom_call.1} parent=39 // pred_fallthru
          _
      $region40: #{tpu_custom_call.1} parent=5 // pred_fallthru
        _
      %p319 = scmp.le.s32.totalorder 1, %s23
      %p320 = scmp.lt.s32.totalorder %s23, 5
      %p321 = pnand %p319, %p320
      %p322 = pneg %p321
      // Predicated region
      $region45: #{tpu_custom_call.1} parent=5 // pred_check
        _
      $region46: #{tpu_custom_call.1} parent=5 // pred_check_branch
        %324 = sbr.rel (%p321) target = $region48
      $region47: #{tpu_custom_call.1} parent=5 // pred_region
        %s325 = ssub.s32 %s23, 1
        %s326 = smul.u32 %s32, 2
        %s327 = sadd.s32 %s326, %s33
        %s328 = smul.u32 8, %s327
        %p329 = scmp.lt.s32.totalorder %s328, 31
        %s330 = scalar_select %p329, %s328, 31
        %s331 = smul.addr %s330, 4
        %s332 = scalar_lea.vmem %s1, %s331
        %p333 = pneg %p65
        %p334 = pneg %p62
        %p335 = pneg %p86
        %p336 = pneg %p83
        %p337 = pneg %p107
        %p338 = pneg %p104
        %p339 = pneg %p128
        %p340 = pneg %p125
        %p341 = pneg %p149
        %p342 = pneg %p146
        %p343 = pneg %p170
        %p344 = pneg %p167
        %p345 = pneg %p191
        %p346 = pneg %p188
        %p347 = pneg %p217
        %p348 = pneg %p214
        %p349 = scmp.lt.s32.totalorder %s32, 1
        %s350 = scalar_select %p349, %s32, 1
        %s351 = scalar_lea.vmem %s8, %s350
        %p352 = pneg %p243
        %p353 = pneg %p240
        %p354 = scmp.lt.s32.totalorder %s32, 1
        %s355 = scalar_select %p354, %s32, 1
        %s356 = scalar_lea.vmem %s9, %s355
        %p357 = pneg %p269
        %p358 = pneg %p266
        %s359 = sand.u32 %s256, 1
        %s360 = scalar_lea.sflag [#allocation9], %s359
        %s361 = sand.u32 %s256, 1
        %s362 = scalar_lea.vmem [#allocation8], %s361
        %s363 = smul.u32 %s32, 2
        %s364 = sadd.s32 %s363, %s33
        %s365 = smul.u32 8, %s364
        %p366 = scmp.lt.s32.totalorder %s365, 31
        %s367 = scalar_select %p366, %s365, 31
        %s368 = smul.addr %s367, 4
        %s369 = scalar_lea.vmem %s1, %s368
        %s370 = smul.u32 %s32, 2
        %s371 = sadd.s32 %s370, %s33
        %s372 = smul.u32 8, %s371
        %p373 = scmp.lt.s32.totalorder %s32, 1
        %s374 = scalar_select %p373, %s32, 1
        %s375 = scalar_lea.vmem %s8, %s374
        %p376 = scmp.lt.s32.totalorder %s32, 1
        %s377 = scalar_select %p376, %s32, 1
        %s378 = scalar_lea.vmem %s9, %s377
        %p380 = scmp.eq.s32.totalorder %s33, 0
        // Predicated region
        $region49: #{tpu_custom_call.1} parent=47 // pred_check
          %p381 = pneg %p380
        $region50: #{tpu_custom_call.1} parent=47 // pred_check_branch
          %383 = sbr.rel (%p381) target = $region52
        $region51: #{tpu_custom_call.1} parent=47 // pred_region
          %vm384 = vcmask 0
          %385 = vst.msk [vmem:[#allocation2] sm:$0x1] %vm384, -inf
          %386 = vst.msk [vmem:[#allocation3] sm:$0x1] %vm384, 0.0
          %387 = vst [vmem:[#allocation4] sm:$0x1] 0.0
        $region52: #{tpu_custom_call.1} parent=47 // pred_fallthru
          _
        %v388 = vld [vmem:[%s369] sm:$0xf]
        %v389 = vld [vmem:[%s369 + $0x4] sm:$0xf]
        %v390 = vld [vmem:[%s369 + $0x8] sm:$0xf]
        %v391 = vld [vmem:[%s369 + $0xc] sm:$0xf]
        %v392 = vld [vmem:[%s369 + $0x10] sm:$0xf]
        %v393 = vld [vmem:[%s369 + $0x14] sm:$0xf]
        %v394 = vld [vmem:[%s369 + $0x18] sm:$0xf]
        %v395 = vld [vmem:[%s369 + $0x1c] sm:$0xf]
        %v396 = vld [vmem:[%s2] sm:$0xf]
        %v397 = vld [vmem:[%s2 + $0x4] sm:$0xf]
        %v398 = vld [vmem:[%s2 + $0x8] sm:$0xf]
        %v399 = vld [vmem:[%s2 + $0xc] sm:$0xf]
        %v400 = vld [vmem:[%s2 + $0x10] sm:$0xf]
        %v401 = vld [vmem:[%s2 + $0x14] sm:$0xf]
        %v402 = vld [vmem:[%s2 + $0x18] sm:$0xf]
        %v403 = vld [vmem:[%s2 + $0x1c] sm:$0xf]
        %v404 = vld [vmem:[%s3] sm:$0x1]
        %v406 = vlaneseq
        %v407 = vshrl.u32 %v406, 7
        %v408 = vsub.s32 0, %v407
        %v409 = vrot.slane %v404, %v408
        %v419 = vunpack.c.l.b16 %v388
        %v420 = vunpack.c.l.b16 %v389
        %v421 = vunpack.c.l.b16 %v390
        %v422 = vunpack.c.l.b16 %v391
        %v423 = vunpack.c.l.b16 %v392
        %v424 = vunpack.c.l.b16 %v393
        %v425 = vunpack.c.l.b16 %v394
        %v426 = vunpack.c.l.b16 %v395
        %v427 = vpack.c.b16 %v420, %v419
        %v428 = vpack.c.b16 %v422, %v421
        %v429 = vpack.c.b16 %v424, %v423
        %v430 = vpack.c.b16 %v426, %v425
        %v439 = vunpack.c.l.b16 %v396
        %v440 = vunpack.c.l.b16 %v397
        %v441 = vunpack.c.l.b16 %v398
        %v442 = vunpack.c.l.b16 %v399
        %v443 = vunpack.c.l.b16 %v400
        %v444 = vunpack.c.l.b16 %v401
        %v445 = vunpack.c.l.b16 %v402
        %v446 = vunpack.c.l.b16 %v403
        %v447 = vpack.c.b16 %v440, %v439
        %v448 = vpack.c.b16 %v442, %v441
        %v449 = vpack.c.b16 %v444, %v443
        %v450 = vpack.c.b16 %v446, %v445
        %vm455 = vcmask 523264
        %v457 = vsel %vm455, %v427, 0
        %v460 = vsel %vm455, %v428, 0
        %v463 = vsel %vm455, %v429, 0
        %v466 = vsel %vm455, %v430, 0
        %468 = vmatprep.subr.bf16.mxu0 0
        %469 = vmatpush1.bf16.msra.mxu0 %v447
        %470 = vmatprep.subr.bf16.mxu0 0
        %471 = vmatpush1.bf16.msra.mxu0 %v448
        %472 = vmatprep.subr.bf16.mxu0 0
        %473 = vmatpush1.bf16.msra.mxu0 %v449
        %474 = vmatprep.subr.bf16.mxu0 0
        %475 = vmatpush1.bf16.msra.mxu0 %v450
        %476 = vmatprep.subr.bf16.mxu0 0
        %477 = vmatpush1.bf16.msra.mxu0 0
        %478 = vmatprep.subr.bf16.mxu0 0
        %479 = vmatpush1.bf16.msra.mxu0 0
        %480 = vmatprep.subr.bf16.mxu0 0
        %481 = vmatpush1.bf16.msra.mxu0 0
        %482 = vmatprep.subr.bf16.mxu0 0
        %483 = vmatpush1.bf16.msra.mxu0 0
        %484 = vmatprep.subr.bf16.mxu0 0
        %485 = vmatpush1.bf16.msra.mxu0 0
        %486 = vmatprep.subr.bf16.mxu0 0
        %487 = vmatpush1.bf16.msra.mxu0 0
        %488 = vmatprep.subr.bf16.mxu0 0
        %489 = vmatpush1.bf16.msra.mxu0 0
        %490 = vmatprep.subr.bf16.mxu0 0
        %491 = vmatpush1.bf16.msra.mxu0 0
        %492 = vmatprep.subr.bf16.mxu0 0
        %493 = vmatpush1.bf16.msra.mxu0 0
        %494 = vmatprep.subr.bf16.mxu0 0
        %495 = vmatpush1.bf16.msra.mxu0 0
        %496 = vmatprep.subr.bf16.mxu0 0
        %497 = vmatpush1.bf16.msra.mxu0 0
        %498 = vmatprep.subr.bf16.mxu0 0
        %499 = vmatpush1.bf16.msra.mxu0 0
        %500 = vmatprep.mubr.bf16.mxu0 0
        %501 = vmatmul.mubr.bf16.gmra.mrb[0].mxu0 %v457
        %v502 = vpop.f32.mrb[0].mxu0
        %v503 = vadd.f32 %v409, %v502
        %v504 = vpop.f32.mrb[0].mxu0
        %v505 = vpop.f32.mrb[0].mxu0
        %v506 = vadd.f32 %v409, %v505
        %v507 = vpop.f32.mrb[0].mxu0
        %508 = vmatprep.mubr.bf16.mxu0 0
        %509 = vmatmul.mubr.bf16.gmra.mrb[0].mxu0 %v460
        %v510 = vpop.f32.mrb[0].mxu0
        %v511 = vadd.f32 %v409, %v510
        %v512 = vpop.f32.mrb[0].mxu0
        %v513 = vpop.f32.mrb[0].mxu0
        %v514 = vadd.f32 %v409, %v513
        %v515 = vpop.f32.mrb[0].mxu0
        %516 = vmatprep.mubr.bf16.mxu0 0
        %517 = vmatmul.mubr.bf16.gmra.mrb[0].mxu0 %v463
        %v518 = vpop.f32.mrb[0].mxu0
        %v519 = vadd.f32 %v409, %v518
        %v520 = vpop.f32.mrb[0].mxu0
        %v521 = vpop.f32.mrb[0].mxu0
        %v522 = vadd.f32 %v409, %v521
        %v523 = vpop.f32.mrb[0].mxu0
        %524 = vmatprep.mubr.bf16.mxu0 0
        %525 = vmatmul.mubr.bf16.gmra.mrb[0].mxu0 %v466
        %v526 = vpop.f32.mrb[0].mxu0
        %v527 = vadd.f32 %v409, %v526
        %v528 = vpop.f32.mrb[0].mxu0
        %v529 = vpop.f32.mrb[0].mxu0
        %v530 = vadd.f32 %v409, %v529
        %v531 = vpop.f32.mrb[0].mxu0
        %532 = vdwg.mxu0
        %v533 = vmax.f32 %v503, 0.0
        %v534 = vmax.f32 %v506, 0.0
        %v535 = vmax.f32 %v511, 0.0
        %v536 = vmax.f32 %v514, 0.0
        %v537 = vmax.f32 %v519, 0.0
        %v538 = vmax.f32 %v522, 0.0
        %v539 = vmax.f32 %v527, 0.0
        %v540 = vmax.f32 %v530, 0.0
        %v541 = vpack.c.bf16 %v534, %v533
        %v542 = vpack.c.bf16 %v536, %v535
        %v543 = vpack.c.bf16 %v538, %v537
        %v544 = vpack.c.bf16 %v540, %v539
        %v545 = vld [vmem:[%s4] sm:$0xff]
        %v546 = vld [vmem:[%s4 + $0x8] sm:$0xff]
        %v547 = vld [vmem:[%s4 + $0x10] sm:$0xff]
        %v548 = vld [vmem:[%s4 + $0x18] sm:$0xff]
        %v549 = vld [vmem:[%s4 + $0x20] sm:$0xff]
        %v550 = vld [vmem:[%s4 + $0x28] sm:$0xff]
        %v551 = vld [vmem:[%s4 + $0x30] sm:$0xff]
        %v552 = vld [vmem:[%s4 + $0x38] sm:$0xff]
        %v553 = vld [vmem:[%s4 + $0x40] sm:$0xff]
        %v554 = vld [vmem:[%s4 + $0x48] sm:$0xff]
        %v555 = vld [vmem:[%s4 + $0x50] sm:$0xff]
        %v556 = vld [vmem:[%s4 + $0x58] sm:$0xff]
        %v557 = vld [vmem:[%s4 + $0x60] sm:$0xff]
        %v558 = vld [vmem:[%s4 + $0x68] sm:$0xff]
        %v559 = vld [vmem:[%s4 + $0x70] sm:$0xff]
        %v560 = vld [vmem:[%s4 + $0x78] sm:$0xff]
        %v561 = vld [vmem:[%s5] sm:$0x3]
        %v563 = vlaneseq
        %v564 = vshrl.u32 %v563, 7
        %v565 = vsub.s32 0, %v564
        %v566 = vrot.slane %v561, %v565
        %v567 = vlaneseq
        %v568 = vshrl.u32 %v567, 7
        %v569 = vsub.s32 1, %v568
        %v570 = vrot.slane %v561, %v569
        %v589 = vunpack.c.l.b16 %v545
        %v590 = vunpack.c.h.b16 %v545
        %v591 = vunpack.c.l.b16 %v546
        %v592 = vunpack.c.h.b16 %v546
        %v593 = vunpack.c.l.b16 %v547
        %v594 = vunpack.c.h.b16 %v547
        %v595 = vunpack.c.l.b16 %v548
        %v596 = vunpack.c.h.b16 %v548
        %v597 = vunpack.c.l.b16 %v549
        %v598 = vunpack.c.h.b16 %v549
        %v599 = vunpack.c.l.b16 %v550
        %v600 = vunpack.c.h.b16 %v550
        %v601 = vunpack.c.l.b16 %v551
        %v602 = vunpack.c.h.b16 %v551
        %v603 = vunpack.c.l.b16 %v552
        %v604 = vunpack.c.h.b16 %v552
        %v605 = vunpack.c.l.b16 %v553
        %v606 = vunpack.c.h.b16 %v553
        %v607 = vunpack.c.l.b16 %v554
        %v608 = vunpack.c.h.b16 %v554
        %v609 = vunpack.c.l.b16 %v555
        %v610 = vunpack.c.h.b16 %v555
        %v611 = vunpack.c.l.b16 %v556
        %v612 = vunpack.c.h.b16 %v556
        %v613 = vunpack.c.l.b16 %v557
        %v614 = vunpack.c.h.b16 %v557
        %v615 = vunpack.c.l.b16 %v558
        %v616 = vunpack.c.h.b16 %v558
        %v617 = vunpack.c.l.b16 %v559
        %v618 = vunpack.c.h.b16 %v559
        %v619 = vunpack.c.l.b16 %v560
        %v620 = vunpack.c.h.b16 %v560
        %v621 = vpack.c.b16 %v591, %v589
        %v622 = vpack.c.b16 %v592, %v590
        %v623 = vpack.c.b16 %v595, %v593
        %v624 = vpack.c.b16 %v596, %v594
        %v625 = vpack.c.b16 %v599, %v597
        %v626 = vpack.c.b16 %v600, %v598
        %v627 = vpack.c.b16 %v603, %v601
        %v628 = vpack.c.b16 %v604, %v602
        %v629 = vpack.c.b16 %v607, %v605
        %v630 = vpack.c.b16 %v608, %v606
        %v631 = vpack.c.b16 %v611, %v609
        %v632 = vpack.c.b16 %v612, %v610
        %v633 = vpack.c.b16 %v615, %v613
        %v634 = vpack.c.b16 %v616, %v614
        %v635 = vpack.c.b16 %v619, %v617
        %v636 = vpack.c.b16 %v620, %v618
        %653 = vmatprep.subr.bf16.mxu0 %v622
        %654 = vmatpush1.bf16.msra.mxu0 %v621
        %655 = vmatprep.subr.bf16.mxu0 %v624
        %656 = vmatpush1.bf16.msra.mxu0 %v623
        %657 = vmatprep.subr.bf16.mxu0 %v626
        %658 = vmatpush1.bf16.msra.mxu0 %v625
        %659 = vmatprep.subr.bf16.mxu0 %v628
        %660 = vmatpush1.bf16.msra.mxu0 %v627
        %661 = vmatprep.subr.bf16.mxu0 %v630
        %662 = vmatpush1.bf16.msra.mxu0 %v629
        %663 = vmatprep.subr.bf16.mxu0 %v632
        %664 = vmatpush1.bf16.msra.mxu0 %v631
        %665 = vmatprep.subr.bf16.mxu0 %v634
        %666 = vmatpush1.bf16.msra.mxu0 %v633
        %667 = vmatprep.subr.bf16.mxu0 %v636
        %668 = vmatpush1.bf16.msra.mxu0 %v635
        %669 = vmatprep.subr.bf16.mxu0 0
        %670 = vmatpush1.bf16.msra.mxu0 0
        %671 = vmatprep.subr.bf16.mxu0 0
        %672 = vmatpush1.bf16.msra.mxu0 0
        %673 = vmatprep.subr.bf16.mxu0 0
        %674 = vmatpush1.bf16.msra.mxu0 0
        %675 = vmatprep.subr.bf16.mxu0 0
        %676 = vmatpush1.bf16.msra.mxu0 0
        %677 = vmatprep.subr.bf16.mxu0 0
        %678 = vmatpush1.bf16.msra.mxu0 0
        %679 = vmatprep.subr.bf16.mxu0 0
        %680 = vmatpush1.bf16.msra.mxu0 0
        %681 = vmatprep.subr.bf16.mxu0 0
        %682 = vmatpush1.bf16.msra.mxu0 0
        %683 = vmatprep.subr.bf16.mxu0 0
        %684 = vmatpush1.bf16.msra.mxu0 0
        %685 = vmatprep.mubr.bf16.mxu0 0
        %686 = vmatmul.mubr.bf16.gmra.mrb[0].mxu0 %v541
        %v687 = vpop.f32.mrb[0].mxu0
        %v688 = vadd.f32 %v566, %v687
        %v689 = vpop.f32.mrb[0].mxu0
        %v690 = vadd.f32 %v570, %v689
        %v691 = vpop.f32.mrb[0].mxu0
        %v692 = vadd.f32 %v566, %v691
        %v693 = vpop.f32.mrb[0].mxu0
        %v694 = vadd.f32 %v570, %v693
        %695 = vmatprep.mubr.bf16.mxu0 0
        %696 = vmatmul.mubr.bf16.gmra.mrb[0].mxu0 %v542
        %v697 = vpop.f32.mrb[0].mxu0
        %v698 = vadd.f32 %v566, %v697
        %v699 = vpop.f32.mrb[0].mxu0
        %v700 = vadd.f32 %v570, %v699
        %v701 = vpop.f32.mrb[0].mxu0
        %v702 = vadd.f32 %v566, %v701
        %v703 = vpop.f32.mrb[0].mxu0
        %v704 = vadd.f32 %v570, %v703
        %705 = vmatprep.mubr.bf16.mxu0 0
        %706 = vmatmul.mubr.bf16.gmra.mrb[0].mxu0 %v543
        %v707 = vpop.f32.mrb[0].mxu0
        %v708 = vadd.f32 %v566, %v707
        %v709 = vpop.f32.mrb[0].mxu0
        %v710 = vadd.f32 %v570, %v709
        %v711 = vpop.f32.mrb[0].mxu0
        %v712 = vadd.f32 %v566, %v711
        %v713 = vpop.f32.mrb[0].mxu0
        %v714 = vadd.f32 %v570, %v713
        %715 = vmatprep.mubr.bf16.mxu0 0
        %716 = vmatmul.mubr.bf16.gmra.mrb[0].mxu0 %v544
        %v717 = vpop.f32.mrb[0].mxu0
        %v718 = vadd.f32 %v566, %v717
        %v719 = vpop.f32.mrb[0].mxu0
        %v720 = vadd.f32 %v570, %v719
        %v721 = vpop.f32.mrb[0].mxu0
        %v722 = vadd.f32 %v566, %v721
        %v723 = vpop.f32.mrb[0].mxu0
        %v724 = vadd.f32 %v570, %v723
        %725 = vdwg.mxu0
        %v726 = vtanh.pop %v688
        %v727 = vtanh.pop %v692
        %v728 = vtanh.pop %v698
        %v729 = vtanh.pop %v702
        %v730 = vtanh.pop %v708
        %v731 = vtanh.pop %v712
        %v732 = vtanh.pop %v718
        %v733 = vtanh.pop %v722
        %v734 = vxor.u32 %v690, 2147483648
        %v735 = vxor.u32 %v694, 2147483648
        %v736 = vxor.u32 %v700, 2147483648
        %v737 = vxor.u32 %v704, 2147483648
        %v738 = vxor.u32 %v710, 2147483648
        %v739 = vxor.u32 %v714, 2147483648
        %v740 = vxor.u32 %v720, 2147483648
        %v741 = vxor.u32 %v724, 2147483648
        %v742 = vmul.f32 %v734, 1.442695
        %v743 = vpow.pop %v742
        %v744 = vmul.f32 %v735, 1.442695
        %v745 = vpow.pop %v744
        %v746 = vmul.f32 %v736, 1.442695
        %v747 = vpow.pop %v746
        %v748 = vmul.f32 %v737, 1.442695
        %v749 = vpow.pop %v748
        %v750 = vmul.f32 %v738, 1.442695
        %v751 = vpow.pop %v750
        %v752 = vmul.f32 %v739, 1.442695
        %v753 = vpow.pop %v752
        %v754 = vmul.f32 %v740, 1.442695
        %v755 = vpow.pop %v754
        %v756 = vmul.f32 %v741, 1.442695
        %v757 = vpow.pop %v756
        %v758 = vadd.f32 %v743, 1.0
        %v759 = vadd.f32 %v745, 1.0
        %v760 = vadd.f32 %v747, 1.0
        %v761 = vadd.f32 %v749, 1.0
        %v762 = vadd.f32 %v751, 1.0
        %v763 = vadd.f32 %v753, 1.0
        %v764 = vadd.f32 %v755, 1.0
        %v765 = vadd.f32 %v757, 1.0
        %v766 = vrcp.pop %v758
        %v767 = vmul.f32 1.0, %v766
        %v768 = vrcp.pop %v759
        %v769 = vmul.f32 1.0, %v768
        %v770 = vrcp.pop %v760
        %v771 = vmul.f32 1.0, %v770
        %v772 = vrcp.pop %v761
        %v773 = vmul.f32 1.0, %v772
        %v774 = vrcp.pop %v762
        %v775 = vmul.f32 1.0, %v774
        %v776 = vrcp.pop %v763
        %v777 = vmul.f32 1.0, %v776
        %v778 = vrcp.pop %v764
        %v779 = vmul.f32 1.0, %v778
        %v780 = vrcp.pop %v765
        %v781 = vmul.f32 1.0, %v780
        %v782 = vmul.f32 %v726, %v767
        %v783 = vmul.f32 %v727, %v769
        %v784 = vmul.f32 %v728, %v771
        %v785 = vmul.f32 %v729, %v773
        %v786 = vmul.f32 %v730, %v775
        %v787 = vmul.f32 %v731, %v777
        %v788 = vmul.f32 %v732, %v779
        %v789 = vmul.f32 %v733, %v781
        %v790 = vld [vmem:[%s6] sm:$0x1]
        %v792 = vlaneseq
        %v793 = vshrl.u32 %v792, 7
        %v794 = vsub.s32 0, %v793
        %v795 = vrot.slane %v790, %v794
        %v797 = vmul.f32 %v782, %v795
        %v798 = vmul.f32 %v783, %v795
        %v799 = vmul.f32 %v784, %v795
        %v800 = vmul.f32 %v785, %v795
        %v801 = vmul.f32 %v786, %v795
        %v802 = vmul.f32 %v787, %v795
        %v803 = vmul.f32 %v788, %v795
        %v804 = vmul.f32 %v789, %v795
        %805 = vadd.xlane.f32.xlu0 %v797
        %v806 = vpop.xlane.xlu0 %805
        %807 = vadd.xlane.f32.xlu0 %v798
        %v808 = vpop.xlane.xlu0 %807
        %809 = vadd.xlane.f32.xlu0 %v799
        %v810 = vpop.xlane.xlu0 %809
        %811 = vadd.xlane.f32.xlu0 %v800
        %v812 = vpop.xlane.xlu0 %811
        %813 = vadd.xlane.f32.xlu0 %v801
        %v814 = vpop.xlane.xlu0 %813
        %815 = vadd.xlane.f32.xlu0 %v802
        %v816 = vpop.xlane.xlu0 %815
        %817 = vadd.xlane.f32.xlu0 %v803
        %v818 = vpop.xlane.xlu0 %817
        %819 = vadd.xlane.f32.xlu0 %v804
        %v820 = vpop.xlane.xlu0 %819
        %v821 = vld [vmem:[#allocation7] sm:$0x1]
        %v823 = vlaneseq
        %v824 = vshrl.u32 %v823, 7
        %v825 = vsub.s32 0, %v824
        %v826 = vrot.slane %v821, %v825
        %v828 = vadd.f32 %v806, %v826
        %v829 = vadd.f32 %v808, %v826
        %v830 = vadd.f32 %v810, %v826
        %v831 = vadd.f32 %v812, %v826
        %v832 = vadd.f32 %v814, %v826
        %v833 = vadd.f32 %v816, %v826
        %v834 = vadd.f32 %v818, %v826
        %v835 = vadd.f32 %v820, %v826
        %s836 = smul.u32 %s32, 2
        %s837 = sadd.s32 %s836, %s33
        %s838 = smul.u32 %s837, 64
        %v839 = vlaneseq
        %v840 = vshrl.u32 %v839, 7
        %v841 = vadd.s32 %v840, 8
        %v842 = vadd.s32 %v840, 16
        %v843 = vadd.s32 %v840, 24
        %v844 = vadd.s32 %v840, 32
        %v845 = vadd.s32 %v840, 40
        %v846 = vadd.s32 %v840, 48
        %v847 = vadd.s32 %v840, 56
        %v848 = vstv %s838
        %v849 = vadd.s32 %v848, %v840
        %v850 = vadd.s32 %v848, %v841
        %v851 = vadd.s32 %v848, %v842
        %v852 = vadd.s32 %v848, %v843
        %v853 = vadd.s32 %v848, %v844
        %v854 = vadd.s32 %v848, %v845
        %v855 = vadd.s32 %v848, %v846
        %v856 = vadd.s32 %v848, %v847
        %s857 = sld [smem:[#allocation6]]
        %v858 = vstv %s857
        %vm859 = vcmp.lt.s32.totalorder %v849, %v858
        %vm860 = vcmp.lt.s32.totalorder %v850, %v858
        %vm861 = vcmp.lt.s32.totalorder %v851, %v858
        %vm862 = vcmp.lt.s32.totalorder %v852, %v858
        %vm863 = vcmp.lt.s32.totalorder %v853, %v858
        %vm864 = vcmp.lt.s32.totalorder %v854, %v858
        %vm865 = vcmp.lt.s32.totalorder %v855, %v858
        %vm866 = vcmp.lt.s32.totalorder %v856, %v858
        %v867 = vsel %vm859, %v828, -1e+30
        %v868 = vsel %vm860, %v829, -1e+30
        %v869 = vsel %vm861, %v830, -1e+30
        %v870 = vsel %vm862, %v831, -1e+30
        %v871 = vsel %vm863, %v832, -1e+30
        %v872 = vsel %vm864, %v833, -1e+30
        %v873 = vsel %vm865, %v834, -1e+30
        %v874 = vsel %vm866, %v835, -1e+30
        %v875 = vld [vmem:[#allocation2] sm:$0x1]
        %vm876 = vcmask 7168
        %v877 = vsel %vm876, %v867, -inf
        %v878 = vsel %vm876, %v868, -inf
        %v879 = vsel %vm876, %v869, -inf
        %v880 = vsel %vm876, %v870, -inf
        %v881 = vsel %vm876, %v871, -inf
        %v882 = vmax.f32 %v877, %v881
        %v883 = vsel %vm876, %v872, -inf
        %v884 = vmax.f32 %v878, %v883
        %v885 = vsel %vm876, %v873, -inf
        %v886 = vmax.f32 %v879, %v885
        %v887 = vsel %vm876, %v874, -inf
        %v888 = vmax.f32 %v880, %v887
        %v889 = vmax.f32 %v882, %v884
        %v890 = vmax.f32 %v886, %v888
        %v891 = vmax.f32 %v889, %v890
        %892 = vmax.xlane.f32.xlu0 %v891
        %v893 = vpop.xlane.xlu0 %892
        %v894 = vrot.slane %v893, 4
        %v895 = vmax.f32 %v893, %v894
        %v896 = vrot.slane %v895, 2
        %v897 = vmax.f32 %v895, %v896
        %v898 = vrot.slane %v897, 1
        %v899 = vmax.f32 %v897, %v898
        %s900 = vtos %v899
        %v901 = vstv %s900
        %v902 = vmax.f32 %v875, %v901
        %v903 = vsub.f32 %v875, %v902
        %v904 = vmul.f32 %v903, 1.442695
        %v905 = vpow.pop %v904
        %v907 = vlaneseq
        %v908 = vshrl.u32 %v907, 7
        %v909 = vsub.s32 0, %v908
        %v910 = vrot.slane %v902, %v909
        %v912 = vsub.f32 %v867, %v910
        %v913 = vsub.f32 %v868, %v910
        %v914 = vsub.f32 %v869, %v910
        %v915 = vsub.f32 %v870, %v910
        %v916 = vsub.f32 %v871, %v910
        %v917 = vsub.f32 %v872, %v910
        %v918 = vsub.f32 %v873, %v910
        %v919 = vsub.f32 %v874, %v910
        %v920 = vmul.f32 %v912, 1.442695
        %v921 = vpow.pop %v920
        %v922 = vmul.f32 %v913, 1.442695
        %v923 = vpow.pop %v922
        %v924 = vmul.f32 %v914, 1.442695
        %v925 = vpow.pop %v924
        %v926 = vmul.f32 %v915, 1.442695
        %v927 = vpow.pop %v926
        %v928 = vmul.f32 %v916, 1.442695
        %v929 = vpow.pop %v928
        %v930 = vmul.f32 %v917, 1.442695
        %v931 = vpow.pop %v930
        %v932 = vmul.f32 %v918, 1.442695
        %v933 = vpow.pop %v932
        %v934 = vmul.f32 %v919, 1.442695
        %v935 = vpow.pop %v934
        %v936 = vld [vmem:[#allocation3] sm:$0x1]
        %v937 = vmul.f32 %v905, %v936
        %v938 = vsel %vm876, %v921, 0.0
        %v939 = vsel %vm876, %v923, 0.0
        %v940 = vadd.f32 %v938, %v939
        %v941 = vsel %vm876, %v925, 0.0
        %v942 = vadd.f32 %v940, %v941
        %v943 = vsel %vm876, %v927, 0.0
        %v944 = vadd.f32 %v942, %v943
        %v945 = vsel %vm876, %v929, 0.0
        %v946 = vadd.f32 %v944, %v945
        %v947 = vsel %vm876, %v931, 0.0
        %v948 = vadd.f32 %v946, %v947
        %v949 = vsel %vm876, %v933, 0.0
        %v950 = vadd.f32 %v948, %v949
        %v951 = vsel %vm876, %v935, 0.0
        %v952 = vadd.f32 %v950, %v951
        %953 = vadd.xlane.f32.xlu0 %v952
        %v954 = vpop.xlane.xlu0 %953
        %v955 = vrot.slane %v954, 4
        %v956 = vadd.f32 %v954, %v955
        %v957 = vrot.slane %v956, 2
        %v958 = vadd.f32 %v956, %v957
        %v959 = vrot.slane %v958, 1
        %v960 = vadd.f32 %v958, %v959
        %s961 = vtos %v960
        %v962 = vstv %s961
        %v963 = vadd.f32 %v937, %v962
        %vm964 = vcmask 0
        %965 = vst.msk [vmem:[#allocation3] sm:$0x1] %vm964, %v963
        %v966 = vld [vmem:[#allocation4] sm:$0x1]
        %968 = vset.pattern.permute.xlu0 0
        %969 = vperm.xlu0 %968, %v905
        %v970 = vpop.permute.xlu0 %969
        %v972 = vlaneseq
        %v973 = vshrl.u32 %v972, 7
        %v974 = vsub.s32 0, %v973
        %v975 = vrot.slane %v970, %v974
        %v976 = vmul.f32 %v975, %v966
        %977 = vxpose.xlu0.b32.start [1/16] %v921, 128
        %978 = vxpose.xlu0.b32.cont [2/16] %v923, 128
        %979 = vxpose.xlu0.b32.cont [3/16] %v925, 128
        %980 = vxpose.xlu0.b32.cont [4/16] %v927, 128
        %981 = vxpose.xlu0.b32.cont [5/16] %v929, 128
        %982 = vxpose.xlu0.b32.cont [6/16] %v931, 128
        %983 = vxpose.xlu0.b32.cont [7/16] %v933, 128
        %984 = vxpose.xlu0.b32.cont [8/16] %v935, 128
        %985 = vxpose.xlu0.b32.cont [9/16] 0.0, 128
        %986 = vxpose.xlu0.b32.cont [10/16] 0.0, 128
        %987 = vxpose.xlu0.b32.cont [11/16] 0.0, 128
        %988 = vxpose.xlu0.b32.cont [12/16] 0.0, 128
        %989 = vxpose.xlu0.b32.cont [13/16] 0.0, 128
        %990 = vxpose.xlu0.b32.cont [14/16] 0.0, 128
        %991 = vxpose.xlu0.b32.cont [15/16] 0.0, 128
        %992 = vxpose.xlu0.b32.end [16/16] 0.0, 128
        %v993 = vpop.trf.xlu0
        %v994 = vpop.trf.xlu0
        %v995 = vpop.trf.xlu0
        %v996 = vpop.trf.xlu0
        %v997 = vpop.trf.xlu0
        %v998 = vpop.trf.xlu0
        %v999 = vpop.trf.xlu0
        %v1000 = vpop.trf.xlu0
        %v1001 = vpop.trf.xlu0
        %v1002 = vpop.trf.xlu0
        %v1003 = vpop.trf.xlu0
        %v1004 = vpop.trf.xlu0
        %v1005 = vpop.trf.xlu0
        %v1006 = vpop.trf.xlu0
        %v1007 = vpop.trf.xlu0
        %v1008 = vpop.trf.xlu0
        %v1010 = vsel %vm455, %v993, 0
        %1012 = vmatprep.subr.mxu0 0.0
        %1013 = vmatpush1.msra.mxu0 %v533
        %1014 = vmatprep.subr.mxu0 0.0
        %1015 = vmatpush1.msra.mxu0 %v534
        %1016 = vmatprep.subr.mxu0 0.0
        %1017 = vmatpush1.msra.mxu0 %v535
        %1018 = vmatprep.subr.mxu0 0.0
        %1019 = vmatpush1.msra.mxu0 %v536
        %1020 = vmatprep.subr.mxu0 0.0
        %1021 = vmatpush1.msra.mxu0 %v537
        %1022 = vmatprep.subr.mxu0 0.0
        %1023 = vmatpush1.msra.mxu0 %v538
        %1024 = vmatprep.subr.mxu0 0.0
        %1025 = vmatpush1.msra.mxu0 %v539
        %1026 = vmatprep.subr.mxu0 0.0
        %1027 = vmatpush1.msra.mxu0 %v540
        %1028 = vmatprep.subr.mxu0 0.0
        %1029 = vmatpush1.msra.mxu0 0.0
        %1030 = vmatprep.subr.mxu0 0.0
        %1031 = vmatpush1.msra.mxu0 0.0
        %1032 = vmatprep.subr.mxu0 0.0
        %1033 = vmatpush1.msra.mxu0 0.0
        %1034 = vmatprep.subr.mxu0 0.0
        %1035 = vmatpush1.msra.mxu0 0.0
        %1036 = vmatprep.subr.mxu0 0.0
        %1037 = vmatpush1.msra.mxu0 0.0
        %1038 = vmatprep.subr.mxu0 0.0
        %1039 = vmatpush1.msra.mxu0 0.0
        %1040 = vmatprep.subr.mxu0 0.0
        %1041 = vmatpush1.msra.mxu0 0.0
        %1042 = vmatprep.subr.mxu0 0.0
        %1043 = vmatpush1.msra.mxu0 0.0
        %1044 = vmatprep.subr.mxu0 0.0
        %1045 = vmatpush1.msra.mxu0 0.0
        %1046 = vmatprep.subr.mxu0 0.0
        %1047 = vmatpush1.msra.mxu0 0.0
        %1048 = vmatprep.subr.mxu0 0.0
        %1049 = vmatpush1.msra.mxu0 0.0
        %1050 = vmatprep.subr.mxu0 0.0
        %1051 = vmatpush1.msra.mxu0 0.0
        %1052 = vmatprep.subr.mxu0 0.0
        %1053 = vmatpush1.msra.mxu0 0.0
        %1054 = vmatprep.subr.mxu0 0.0
        %1055 = vmatpush1.msra.mxu0 0.0
        %1056 = vmatprep.subr.mxu0 0.0
        %1057 = vmatpush1.msra.mxu0 0.0
        %1058 = vmatprep.subr.mxu0 0.0
        %1059 = vmatpush1.msra.mxu0 0.0
        %1060 = vmatprep.subr.mxu0 0.0
        %1061 = vmatpush1.msra.mxu0 0.0
        %1062 = vmatprep.subr.mxu0 0.0
        %1063 = vmatpush1.msra.mxu0 0.0
        %1064 = vmatprep.subr.mxu0 0.0
        %1065 = vmatpush1.msra.mxu0 0.0
        %1066 = vmatprep.subr.mxu0 0.0
        %1067 = vmatpush1.msra.mxu0 0.0
        %1068 = vmatprep.subr.mxu0 0.0
        %1069 = vmatpush1.msra.mxu0 0.0
        %1070 = vmatprep.subr.mxu0 0.0
        %1071 = vmatpush1.msra.mxu0 0.0
        %1072 = vmatprep.subr.mxu0 0.0
        %1073 = vmatpush1.msra.mxu0 0.0
        %1074 = vmatprep.subr.mxu0 0.0
        %1075 = vmatpush1.msra.mxu0 0.0
        %1076 = vmatprep.mubr.f32.mxu0 0.0
        %1077 = vmatmul.mubr.f32.gmra.mrb[0].mxu0 %v1010
        %v1078 = vpop.f32.mrb[0].mxu0
        %v1079 = vadd.f32 0.0, %v1078
        %v1080 = vpop.f32.mrb[0].mxu0
        %1081 = vdwg.mxu0
        %v1082 = vadd.f32 %v976, %v1079
        %1083 = vst [vmem:[#allocation4] sm:$0x1] %v1082
        %1084 = vst.msk [vmem:[#allocation2] sm:$0x1] %vm964, %v902
        %p1085 = scmp.eq.s32.totalorder %s33, 1
        // Predicated region
        $region53: #{tpu_custom_call.1} parent=47 // pred_check
          %p1086 = pneg %p1085
        $region54: #{tpu_custom_call.1} parent=47 // pred_check_branch
          %1088 = sbr.rel (%p1086) target = $region56
        $region55: #{tpu_custom_call.1} parent=47 // pred_region
          %v1089 = vld [vmem:[#allocation2] sm:$0x1]
          %1090 = vst.msk [vmem:[%s375] sm:$0x1] %vm964, %v1089
          %v1091 = vld [vmem:[#allocation3] sm:$0x1]
          %1092 = vst.msk [vmem:[%s378] sm:$0x1] %vm964, %v1091
          %v1093 = vld [vmem:[#allocation4] sm:$0x1]
          %1094 = vst [vmem:[%s362] sm:$0x1] %v1093
        $region56: #{tpu_custom_call.1} parent=47 // pred_fallthru
          _
        %p1095 = scmp.lt.s32.totalorder %s32, 1
        %s1096 = scalar_select %p1095, %s32, 1
        %s1097 = scalar_lea.vmem %s8, %s1096
        %p1098 = scmp.lt.s32.totalorder %s32, 1
        %s1099 = scalar_select %p1098, %s32, 1
        %s1100 = scalar_lea.vmem %s9, %s1099
        %s1101 = sand.u32 %s256, 1
        %s1102 = scalar_lea.sflag [#allocation9], %s1101
        %s1103 = sand.u32 %s256, 1
        %s1104 = scalar_lea.vmem [#allocation8], %s1103
        // Predicated region
        $region57: #{tpu_custom_call.1} parent=47 // pred_check
          %p1105 = pneg %p214
        $region58: #{tpu_custom_call.1} parent=47 // pred_check_branch
          %1107 = sbr.rel (%p1105) target = $region60
        $region59: #{tpu_custom_call.1} parent=47 // pred_region
          _
        $region60: #{tpu_custom_call.1} parent=47 // pred_fallthru
          _
        // Predicated region
        $region61: #{tpu_custom_call.1} parent=47 // pred_check
          %p1108 = pneg %p240
        $region62: #{tpu_custom_call.1} parent=47 // pred_check_branch
          %1110 = sbr.rel (%p1108) target = $region64
        $region63: #{tpu_custom_call.1} parent=47 // pred_region
          _
        $region64: #{tpu_custom_call.1} parent=47 // pred_fallthru
          _
        // Predicated region
        $region65: #{tpu_custom_call.1} parent=47 // pred_check
          %p1111 = pneg %p266
        $region66: #{tpu_custom_call.1} parent=47 // pred_check_branch
          %1113 = sbr.rel (%p1111) target = $region68
        $region67: #{tpu_custom_call.1} parent=47 // pred_region
          %s1115 = ssub.s32 16, 16
          %1116 = vsyncadd %s1102, %s1115
          %s1117 = smul.addr %s32, 16
          %s1118 = scalar_lea.hbm %s10, %s1117
          %s1120 = sshll.u32 %s1104, 4
          %s1121 = int_to_ptr.vmem [resolvable:$true] %s1120
          %1123 = dma.vmem_to_hbm [thread:$0]  %s1121, 16, %s1118, %s1102
        $region68: #{tpu_custom_call.1} parent=47 // pred_fallthru
          _
      $region48: #{tpu_custom_call.1} parent=5 // pred_fallthru
        _
      %p1124 = scmp.le.s32.totalorder 2, %s23
      // Predicated region
      $region69: #{tpu_custom_call.1} parent=5 // pred_check
        %p1125 = pneg %p1124
      $region70: #{tpu_custom_call.1} parent=5 // pred_check_branch
        %1127 = sbr.rel (%p1125) target = $region72
      $region71: #{tpu_custom_call.1} parent=5 // pred_region
        %s1128 = ssub.s32 %s23, 2
        // Predicated region
        $region73: #{tpu_custom_call.1} parent=71 // pred_check
          %p1129 = pneg %p220
        $region74: #{tpu_custom_call.1} parent=71 // pred_check_branch
          %1131 = sbr.rel (%p1129) target = $region76
        $region75: #{tpu_custom_call.1} parent=71 // pred_region
          %p1132 = scmp.lt.s32.totalorder %s34, 1
          %s1133 = scalar_select %p1132, %s34, 1
          %s1134 = scalar_lea.vmem %s8, %s1133
        $region76: #{tpu_custom_call.1} parent=71 // pred_fallthru
          _
        // Predicated region
        $region77: #{tpu_custom_call.1} parent=71 // pred_check
          %p1135 = pneg %p246
        $region78: #{tpu_custom_call.1} parent=71 // pred_check_branch
          %1137 = sbr.rel (%p1135) target = $region80
        $region79: #{tpu_custom_call.1} parent=71 // pred_region
          %p1138 = scmp.lt.s32.totalorder %s34, 1
          %s1139 = scalar_select %p1138, %s34, 1
          %s1140 = scalar_lea.vmem %s9, %s1139
        $region80: #{tpu_custom_call.1} parent=71 // pred_fallthru
          _
        // Predicated region
        $region81: #{tpu_custom_call.1} parent=71 // pred_check
          %p1141 = pneg %p272
        $region82: #{tpu_custom_call.1} parent=71 // pred_check_branch
          %1143 = sbr.rel (%p1141) target = $region84
        $region83: #{tpu_custom_call.1} parent=71 // pred_region
          %s1144 = sand.u32 %s257, 1
          %s1145 = scalar_lea.sflag [#allocation9], %s1144
          %s1146 = sand.u32 %s257, 1
          %s1147 = scalar_lea.vmem [#allocation8], %s1146
          %1148 = dma.done %s1145, 16
        $region84: #{tpu_custom_call.1} parent=71 // pred_fallthru
          _
      $region72: #{tpu_custom_call.1} parent=5 // pred_fallthru
        _
    $region6: #{tpu_custom_call.1} parent=1 // loop_footer
      %s27 = sadd.s32 1, %s23
    $region7: #{tpu_custom_call.1} parent=1 // loop_footer_branch
      %22 = sbr.rel target = $region3
    $region8: #{tpu_custom_call.1} parent=1 // loop_exit
      _
    %1149 = vsyncpa [#allocation9], 1
    %s1150 = scalar_lea.sflag [#allocation9], 1
    %1151 = vsyncpa %s1150, 1

</llo_original>
